<compile_context>
chip_gen: v5e
topology: v5e:2x2
jax: 0.10.0
libtpu: 0.0.40
codegen_flags: <defaults>
</compile_context>

<pallas_src>
import functools

import jax
import jax.numpy as jnp
from jax.experimental import pallas as pl
from jax.experimental.pallas import tpu as pltpu


OUT_CHANNELS = 96      # conv output channels in the PyTorch module
KERNEL_SIZE = 3
LINEAR_OUT = 128
CPAD = 128             # lane-dense channel padding (96 -> 128)


# ----------------------------- fused Pallas kernel ------------------------- #

def fused_kernel(x_ref, wc_ref, bc_ref, lw_ref, lb_ref, o_ref, *,
                 block_num, batch_tile, seq_len):
    """Whole TargetRepresentation forward for one batch tile.

    x_ref : (1, batch_tile*L, CPAD)         channels-last, zero-padded input,
                                            batch elements stacked along rows
    wc_ref: (n_layers, 3*CPAD, CPAD)        im2col conv weights (zero-padded)
    bc_ref: (n_layers, 1, CPAD)             conv biases (zero-padded)
    lw_ref: (block_num*CPAD, LINEAR_OUT)    linear weight (rows zero-padded)
    lb_ref: (1, LINEAR_OUT)                 linear bias
    o_ref : (1, batch_tile, LINEAR_OUT)
    """
    L = seq_len
    x0 = x_ref[0]                                        # (batch_tile*L, CPAD)

    feats = []
    layer = 0
    for blk in range(block_num):                         # static unroll
        h = x0
        rows = batch_tile * L
        for _ in range(blk + 1):                         # static unroll
            rout = rows - (KERNEL_SIZE - 1)
            # im2col: lane-aligned concat of the K shifted views -> one MXU
            # matmul with contraction dim 3*CPAD instead of 3 tiny matmuls,
            # covering all batch_tile elements at once.
            cols = jnp.concatenate(
                [h[k:k + rout, :] for k in range(KERNEL_SIZE)], axis=-1)
            acc = jnp.dot(cols, wc_ref[layer],
                          preferred_element_type=jnp.float32) + bc_ref[layer]
            h = jnp.maximum(acc, 0.0)                    # ReLU in f32
            rows = rout
            layer += 1
        # AdaptiveMaxPool1d(1) per batch element.  The valid outputs of batch
        # element i live in rows [i*L, i*L + L - 2*depth); rows whose conv
        # window crossed a batch boundary are simply excluded by this static
        # slice (padded channels are exactly 0 after ReLU, so the pad stays 0).
        valid = L - (KERNEL_SIZE - 1) * (blk + 1)
        segs = [jnp.max(h[i * L:i * L + valid, :], axis=0, keepdims=True)
                for i in range(batch_tile)]
        feats.append(jnp.concatenate(segs, axis=0))      # (batch_tile, CPAD)

    cat = jnp.concatenate(feats, axis=-1)                # (bt, block_num*CPAD)
    out = jnp.dot(cat, lw_ref[...],
                  preferred_element_type=jnp.float32) + lb_ref[...]
    o_ref[0] = out.astype(o_ref.dtype)                   # lane-dense 128 store


# ----------------------------- param packing ------------------------------- #

def _pack_params(params):
    """Zero-pad & reshape params to the lane-dense layout the kernel expects."""
    block_num = len(params["blocks"])
    wc_list, bc_list = [], []
    for layers in params["blocks"]:
        for w, b in layers:                      # w: (K, cin, 96), b: (96,)
            k, cin, cout = w.shape
            wp = jnp.zeros((k, CPAD, CPAD), jnp.float32).at[:, :cin, :cout].set(w)
            wc_list.append(wp.reshape(k * CPAD, CPAD))   # rows = tap*CPAD + ci
            bc_list.append(
                jnp.zeros((1, CPAD), jnp.float32).at[0, :cout].set(b))
    wc = jnp.stack(wc_list)                      # (n_layers, K*CPAD, CPAD)
    bc = jnp.stack(bc_list)                      # (n_layers, 1, CPAD)

    lw = params["lin_w"]                         # (block_num*96, 128)
    out_dim = lw.shape[1]
    lw3 = lw.reshape(block_num, OUT_CHANNELS, out_dim)
    lwp = jnp.zeros((block_num, CPAD, out_dim), jnp.float32)
    lwp = lwp.at[:, :OUT_CHANNELS, :].set(lw3).reshape(block_num * CPAD, out_dim)
    lb = params["lin_b"].reshape(1, out_dim)
    return wc, bc, lwp, lb


# ----------------------------- forward (single pallas_call) ---------------- #

@jax.jit
def target_representation(params, x_ncl):
    """Forward pass. x_ncl: (B, embedding_num, L) as in PyTorch NCL."""
    block_num = len(params["blocks"])
    n_layers = block_num * (block_num + 1) // 2
    B, cin0, L = x_ncl.shape
    assert cin0 <= CPAD, "embedding_num must be <= 128 for this kernel"
    assert L >= (KERNEL_SIZE - 1) * block_num + 1, "sequence too short"

    wc, bc, lw, lb = _pack_params(params)

    # Batch tiling: keep >=2 grid steps whenever B >= 2 (megacore sharding on
    # v7x) while packing up to 8 elements per step (bigger im2col matmuls,
    # fewer grid-step overheads) for large batches.
    bt = max(1, min(8, pl.cdiv(B, 2)))
    n_tiles = pl.cdiv(B, bt)
    b_pad = n_tiles * bt

    # Tiny NCL -> channels-last transpose + lane/batch zero-pad: one fused XLA
    # op on a few-KB tensor; the contiguous reshape to (n_tiles, bt*L, CPAD)
    # is free.  All heavy compute happens inside the single kernel below.
    x_p = jnp.pad(jnp.transpose(x_ncl, (0, 2, 1)),
                  ((0, b_pad - B), (0, 0), (0, CPAD - cin0)))
    x_p = x_p.reshape(n_tiles, bt * L, CPAD)

    out = pl.pallas_call(
        functools.partial(fused_kernel, block_num=block_num,
                          batch_tile=bt, seq_len=L),
        out_shape=jax.ShapeDtypeStruct((n_tiles, bt, LINEAR_OUT), jnp.float32),
        grid=(n_tiles,),
        in_specs=[
            pl.BlockSpec((1, bt * L, CPAD), lambda b: (b, 0, 0)),
            pl.BlockSpec((n_layers, KERNEL_SIZE * CPAD, CPAD),
                         lambda b: (0, 0, 0)),
            pl.BlockSpec((n_layers, 1, CPAD), lambda b: (0, 0, 0)),
            pl.BlockSpec((block_num * CPAD, LINEAR_OUT), lambda b: (0, 0)),
            pl.BlockSpec((1, LINEAR_OUT), lambda b: (0, 0)),
        ],
        out_specs=pl.BlockSpec((1, bt, LINEAR_OUT), lambda b: (b, 0, 0)),
        compiler_params=pltpu.CompilerParams(
            dimension_semantics=("parallel",)),   # megacore sharding on v7x
    )(x_p, wc, bc, lw, lb)
    return out.reshape(b_pad, LINEAR_OUT)[:B]


# ----------------------------- parameter init ------------------------------ #

def init_params(key, block_num, embedding_num):
    """Deterministic parameter init (shapes match the PyTorch module)."""
    params = {"blocks": [], "lin_w": None, "lin_b": None}
    for block_idx in range(block_num):
        layers = []
        for layer_idx in range(block_idx + 1):
            cin = embedding_num if layer_idx == 0 else OUT_CHANNELS
            key, kw, kb = jax.random.split(key, 3)
            scale = 1.0 / jnp.sqrt(cin * KERNEL_SIZE)
            w = jax.random.normal(
                kw, (KERNEL_SIZE, cin, OUT_CHANNELS), jnp.float32) * scale
            b = jax.random.normal(kb, (OUT_CHANNELS,), jnp.float32) * scale
            layers.append((w, b))
        params["blocks"].append(layers)
    fan_in = block_num * OUT_CHANNELS
    key, kw, kb = jax.random.split(key, 3)
    scale = 1.0 / jnp.sqrt(fan_in)
    params["lin_w"] = jax.random.normal(kw, (fan_in, LINEAR_OUT), jnp.float32) * scale
    params["lin_b"] = jax.random.normal(kb, (LINEAR_OUT,), jnp.float32) * scale
    return params


# ----------------------------- reference (pure JAX) ------------------------ #

def _ref_conv1d_relu(x, w, b):
    B, L, Cin = x.shape
    K, _, Cout = w.shape
    Lout = L - K + 1
    acc = jnp.broadcast_to(b, (B, Lout, Cout)).astype(jnp.float32)
    for k in range(K):
        acc = acc + jnp.einsum("blc,co->blo", x[:, k:k + Lout, :], w[k],
                               precision=jax.lax.Precision.HIGHEST)
    return jnp.maximum(acc, 0.0)


def _ref_forward(params, x_ncl):
    x = jnp.transpose(x_ncl, (0, 2, 1))
    feats = []
    for layers in params["blocks"]:
        h = x
        for w, b in layers:
            h = _ref_conv1d_relu(h, w, b)
        feats.append(jnp.max(h, axis=1))
    cat = jnp.concatenate(feats, axis=-1)
    return jnp.dot(cat, params["lin_w"],
                   precision=jax.lax.Precision.HIGHEST) + params["lin_b"]


# --------------------------------- main ------------------------------------ #

if __name__ == "__main__":
    BLOCK_NUM = 3
    EMBEDDING_NUM = 32   # in_channels of the first conv of every block
    BATCH = 2
    SEQ = 16

    key = jax.random.PRNGKey(0)
    key, kx, kp = jax.random.split(key, 3)
    params = init_params(kp, BLOCK_NUM, EMBEDDING_NUM)
    x = jax.random.normal(kx, (BATCH, EMBEDDING_NUM, SEQ), jnp.float32)  # NCL

    out = target_representation(params, x)
    out = jax.block_until_ready(out)

    assert out.shape == (BATCH, LINEAR_OUT), out.shape

    ref = jax.block_until_ready(_ref_forward(params, x))
    assert jnp.allclose(out, ref, rtol=1e-3, atol=1e-3), (
        float(jnp.max(jnp.abs(out - ref)))
    )

    print("KERNEL_OK")
</pallas_src>

<mosaic_0001>
module attributes {stable_mosaic.version = 11 : i64} {
  func.func @fused_kernel(%arg0: i32, %arg1: memref<1x16x128xf32, #tpu.memory_space<vmem>>, %arg2: memref<6x384x128xf32, #tpu.memory_space<vmem>>, %arg3: memref<6x1x128xf32, #tpu.memory_space<vmem>>, %arg4: memref<384x128xf32, #tpu.memory_space<vmem>>, %arg5: memref<1x128xf32, #tpu.memory_space<vmem>>, %arg6: memref<1x1x128xf32, #tpu.memory_space<vmem>>) attributes {dimension_semantics = [#tpu.dimension_semantics<parallel>], iteration_bounds = array<i64: 2>, scalar_prefetch = 0 : i64, scratch_operands = 0 : i64, tpu.core_type = #tpu.core_type<tc>, window_params = [{transform_indices = @transform_0, window_bounds = array<i64: 1, 16, 128>}, {pipeline_mode = #tpu.pipeline_mode<synchronous>, transform_indices = @transform_1, window_bounds = array<i64: 6, 384, 128>}, {pipeline_mode = #tpu.pipeline_mode<synchronous>, transform_indices = @transform_2, window_bounds = array<i64: 6, 1, 128>}, {pipeline_mode = #tpu.pipeline_mode<synchronous>, transform_indices = @transform_3, window_bounds = array<i64: 384, 128>}, {pipeline_mode = #tpu.pipeline_mode<synchronous>, transform_indices = @transform_4, window_bounds = array<i64: 1, 128>}, {transform_indices = @transform_5, window_bounds = array<i64: 1, 1, 128>}]} {
    %c0 = arith.constant 0 : index
    %c0_0 = arith.constant 0 : index
    %c0_1 = arith.constant 0 : index
    %0 = vector.load %arg1[%c0, %c0_0, %c0_1] : memref<1x16x128xf32, #tpu.memory_space<vmem>>, vector<1x16x128xf32>
    %1 = vector.shape_cast %0 : vector<1x16x128xf32> to vector<16x128xf32>
    %2 = vector.extract_strided_slice %1 {offsets = [0, 0], sizes = [14, 128], strides = [1, 1]} : vector<16x128xf32> to vector<14x128xf32>
    %3 = vector.extract_strided_slice %1 {offsets = [1, 0], sizes = [14, 128], strides = [1, 1]} : vector<16x128xf32> to vector<14x128xf32>
    %4 = vector.extract_strided_slice %1 {offsets = [2, 0], sizes = [14, 128], strides = [1, 1]} : vector<16x128xf32> to vector<14x128xf32>
    %5 = tpu.concatenate %2, %3, %4 in 1 : vector<14x128xf32>, vector<14x128xf32>, vector<14x128xf32> -> vector<14x384xf32>
    %c0_2 = arith.constant 0 : index
    %c0_3 = arith.constant 0 : index
    %c0_4 = arith.constant 0 : index
    %6 = vector.load %arg2[%c0_2, %c0_3, %c0_4] : memref<6x384x128xf32, #tpu.memory_space<vmem>>, vector<1x384x128xf32>
    %7 = vector.shape_cast %6 : vector<1x384x128xf32> to vector<384x128xf32>
    %cst = arith.constant dense<0.000000e+00> : vector<14x128xf32>
    %8 = tpu.matmul %5, %7, %cst {dimension_numbers = #tpu.dot_dimension_numbers<[1], [0], [0], [1], [0, 0, 1, 1], [], []>} : vector<14x384xf32>, vector<384x128xf32>, vector<14x128xf32> -> vector<14x128xf32>
    %c0_5 = arith.constant 0 : index
    %c0_6 = arith.constant 0 : index
    %c0_7 = arith.constant 0 : index
    %9 = vector.load %arg3[%c0_5, %c0_6, %c0_7] : memref<6x1x128xf32, #tpu.memory_space<vmem>>, vector<1x1x128xf32>
    %10 = vector.shape_cast %9 : vector<1x1x128xf32> to vector<1x128xf32>
    %11 = vector.broadcast %10 : vector<1x128xf32> to vector<14x128xf32>
    %12 = arith.addf %8, %11 : vector<14x128xf32>
    %cst_8 = arith.constant 0.000000e+00 : f32
    %13 = vector.broadcast %cst_8 : f32 to vector<14x128xf32>
    %14 = arith.maximumf %12, %13 : vector<14x128xf32>
    %cst_9 = arith.constant dense<0xFF800000> : vector<128xf32>
    %15 = vector.multi_reduction <maximumf>, %14, %cst_9 [0] : vector<14x128xf32> to vector<128xf32>
    %16 = vector.shape_cast %15 : vector<128xf32> to vector<1x128xf32>
    %17 = vector.extract_strided_slice %1 {offsets = [0, 0], sizes = [14, 128], strides = [1, 1]} : vector<16x128xf32> to vector<14x128xf32>
    %18 = vector.extract_strided_slice %1 {offsets = [1, 0], sizes = [14, 128], strides = [1, 1]} : vector<16x128xf32> to vector<14x128xf32>
    %19 = vector.extract_strided_slice %1 {offsets = [2, 0], sizes = [14, 128], strides = [1, 1]} : vector<16x128xf32> to vector<14x128xf32>
    %20 = tpu.concatenate %17, %18, %19 in 1 : vector<14x128xf32>, vector<14x128xf32>, vector<14x128xf32> -> vector<14x384xf32>
    %c1 = arith.constant 1 : index
    %c0_10 = arith.constant 0 : index
    %c0_11 = arith.constant 0 : index
    %21 = vector.load %arg2[%c1, %c0_10, %c0_11] : memref<6x384x128xf32, #tpu.memory_space<vmem>>, vector<1x384x128xf32>
    %22 = vector.shape_cast %21 : vector<1x384x128xf32> to vector<384x128xf32>
    %cst_12 = arith.constant dense<0.000000e+00> : vector<14x128xf32>
    %23 = tpu.matmul %20, %22, %cst_12 {dimension_numbers = #tpu.dot_dimension_numbers<[1], [0], [0], [1], [0, 0, 1, 1], [], []>} : vector<14x384xf32>, vector<384x128xf32>, vector<14x128xf32> -> vector<14x128xf32>
    %c1_13 = arith.constant 1 : index
    %c0_14 = arith.constant 0 : index
    %c0_15 = arith.constant 0 : index
    %24 = vector.load %arg3[%c1_13, %c0_14, %c0_15] : memref<6x1x128xf32, #tpu.memory_space<vmem>>, vector<1x1x128xf32>
    %25 = vector.shape_cast %24 : vector<1x1x128xf32> to vector<1x128xf32>
    %26 = vector.broadcast %25 : vector<1x128xf32> to vector<14x128xf32>
    %27 = arith.addf %23, %26 : vector<14x128xf32>
    %cst_16 = arith.constant 0.000000e+00 : f32
    %28 = vector.broadcast %cst_16 : f32 to vector<14x128xf32>
    %29 = arith.maximumf %27, %28 : vector<14x128xf32>
    %30 = vector.extract_strided_slice %29 {offsets = [0, 0], sizes = [12, 128], strides = [1, 1]} : vector<14x128xf32> to vector<12x128xf32>
    %31 = vector.extract_strided_slice %29 {offsets = [1, 0], sizes = [12, 128], strides = [1, 1]} : vector<14x128xf32> to vector<12x128xf32>
    %32 = vector.extract_strided_slice %29 {offsets = [2, 0], sizes = [12, 128], strides = [1, 1]} : vector<14x128xf32> to vector<12x128xf32>
    %33 = tpu.concatenate %30, %31, %32 in 1 : vector<12x128xf32>, vector<12x128xf32>, vector<12x128xf32> -> vector<12x384xf32>
    %c2 = arith.constant 2 : index
    %c0_17 = arith.constant 0 : index
    %c0_18 = arith.constant 0 : index
    %34 = vector.load %arg2[%c2, %c0_17, %c0_18] : memref<6x384x128xf32, #tpu.memory_space<vmem>>, vector<1x384x128xf32>
    %35 = vector.shape_cast %34 : vector<1x384x128xf32> to vector<384x128xf32>
    %cst_19 = arith.constant dense<0.000000e+00> : vector<12x128xf32>
    %36 = tpu.matmul %33, %35, %cst_19 {dimension_numbers = #tpu.dot_dimension_numbers<[1], [0], [0], [1], [0, 0, 1, 1], [], []>} : vector<12x384xf32>, vector<384x128xf32>, vector<12x128xf32> -> vector<12x128xf32>
    %c2_20 = arith.constant 2 : index
    %c0_21 = arith.constant 0 : index
    %c0_22 = arith.constant 0 : index
    %37 = vector.load %arg3[%c2_20, %c0_21, %c0_22] : memref<6x1x128xf32, #tpu.memory_space<vmem>>, vector<1x1x128xf32>
    %38 = vector.shape_cast %37 : vector<1x1x128xf32> to vector<1x128xf32>
    %39 = vector.broadcast %38 : vector<1x128xf32> to vector<12x128xf32>
    %40 = arith.addf %36, %39 : vector<12x128xf32>
    %cst_23 = arith.constant 0.000000e+00 : f32
    %41 = vector.broadcast %cst_23 : f32 to vector<12x128xf32>
    %42 = arith.maximumf %40, %41 : vector<12x128xf32>
    %cst_24 = arith.constant dense<0xFF800000> : vector<128xf32>
    %43 = vector.multi_reduction <maximumf>, %42, %cst_24 [0] : vector<12x128xf32> to vector<128xf32>
    %44 = vector.shape_cast %43 : vector<128xf32> to vector<1x128xf32>
    %45 = vector.extract_strided_slice %1 {offsets = [0, 0], sizes = [14, 128], strides = [1, 1]} : vector<16x128xf32> to vector<14x128xf32>
    %46 = vector.extract_strided_slice %1 {offsets = [1, 0], sizes = [14, 128], strides = [1, 1]} : vector<16x128xf32> to vector<14x128xf32>
    %47 = vector.extract_strided_slice %1 {offsets = [2, 0], sizes = [14, 128], strides = [1, 1]} : vector<16x128xf32> to vector<14x128xf32>
    %48 = tpu.concatenate %45, %46, %47 in 1 : vector<14x128xf32>, vector<14x128xf32>, vector<14x128xf32> -> vector<14x384xf32>
    %c3 = arith.constant 3 : index
    %c0_25 = arith.constant 0 : index
    %c0_26 = arith.constant 0 : index
    %49 = vector.load %arg2[%c3, %c0_25, %c0_26] : memref<6x384x128xf32, #tpu.memory_space<vmem>>, vector<1x384x128xf32>
    %50 = vector.shape_cast %49 : vector<1x384x128xf32> to vector<384x128xf32>
    %cst_27 = arith.constant dense<0.000000e+00> : vector<14x128xf32>
    %51 = tpu.matmul %48, %50, %cst_27 {dimension_numbers = #tpu.dot_dimension_numbers<[1], [0], [0], [1], [0, 0, 1, 1], [], []>} : vector<14x384xf32>, vector<384x128xf32>, vector<14x128xf32> -> vector<14x128xf32>
    %c3_28 = arith.constant 3 : index
    %c0_29 = arith.constant 0 : index
    %c0_30 = arith.constant 0 : index
    %52 = vector.load %arg3[%c3_28, %c0_29, %c0_30] : memref<6x1x128xf32, #tpu.memory_space<vmem>>, vector<1x1x128xf32>
    %53 = vector.shape_cast %52 : vector<1x1x128xf32> to vector<1x128xf32>
    %54 = vector.broadcast %53 : vector<1x128xf32> to vector<14x128xf32>
    %55 = arith.addf %51, %54 : vector<14x128xf32>
    %cst_31 = arith.constant 0.000000e+00 : f32
    %56 = vector.broadcast %cst_31 : f32 to vector<14x128xf32>
    %57 = arith.maximumf %55, %56 : vector<14x128xf32>
    %58 = vector.extract_strided_slice %57 {offsets = [0, 0], sizes = [12, 128], strides = [1, 1]} : vector<14x128xf32> to vector<12x128xf32>
    %59 = vector.extract_strided_slice %57 {offsets = [1, 0], sizes = [12, 128], strides = [1, 1]} : vector<14x128xf32> to vector<12x128xf32>
    %60 = vector.extract_strided_slice %57 {offsets = [2, 0], sizes = [12, 128], strides = [1, 1]} : vector<14x128xf32> to vector<12x128xf32>
    %61 = tpu.concatenate %58, %59, %60 in 1 : vector<12x128xf32>, vector<12x128xf32>, vector<12x128xf32> -> vector<12x384xf32>
    %c4 = arith.constant 4 : index
    %c0_32 = arith.constant 0 : index
    %c0_33 = arith.constant 0 : index
    %62 = vector.load %arg2[%c4, %c0_32, %c0_33] : memref<6x384x128xf32, #tpu.memory_space<vmem>>, vector<1x384x128xf32>
    %63 = vector.shape_cast %62 : vector<1x384x128xf32> to vector<384x128xf32>
    %cst_34 = arith.constant dense<0.000000e+00> : vector<12x128xf32>
    %64 = tpu.matmul %61, %63, %cst_34 {dimension_numbers = #tpu.dot_dimension_numbers<[1], [0], [0], [1], [0, 0, 1, 1], [], []>} : vector<12x384xf32>, vector<384x128xf32>, vector<12x128xf32> -> vector<12x128xf32>
    %c4_35 = arith.constant 4 : index
    %c0_36 = arith.constant 0 : index
    %c0_37 = arith.constant 0 : index
    %65 = vector.load %arg3[%c4_35, %c0_36, %c0_37] : memref<6x1x128xf32, #tpu.memory_space<vmem>>, vector<1x1x128xf32>
    %66 = vector.shape_cast %65 : vector<1x1x128xf32> to vector<1x128xf32>
    %67 = vector.broadcast %66 : vector<1x128xf32> to vector<12x128xf32>
    %68 = arith.addf %64, %67 : vector<12x128xf32>
    %cst_38 = arith.constant 0.000000e+00 : f32
    %69 = vector.broadcast %cst_38 : f32 to vector<12x128xf32>
    %70 = arith.maximumf %68, %69 : vector<12x128xf32>
    %71 = vector.extract_strided_slice %70 {offsets = [0, 0], sizes = [10, 128], strides = [1, 1]} : vector<12x128xf32> to vector<10x128xf32>
    %72 = vector.extract_strided_slice %70 {offsets = [1, 0], sizes = [10, 128], strides = [1, 1]} : vector<12x128xf32> to vector<10x128xf32>
    %73 = vector.extract_strided_slice %70 {offsets = [2, 0], sizes = [10, 128], strides = [1, 1]} : vector<12x128xf32> to vector<10x128xf32>
    %74 = tpu.concatenate %71, %72, %73 in 1 : vector<10x128xf32>, vector<10x128xf32>, vector<10x128xf32> -> vector<10x384xf32>
    %c5 = arith.constant 5 : index
    %c0_39 = arith.constant 0 : index
    %c0_40 = arith.constant 0 : index
    %75 = vector.load %arg2[%c5, %c0_39, %c0_40] : memref<6x384x128xf32, #tpu.memory_space<vmem>>, vector<1x384x128xf32>
    %76 = vector.shape_cast %75 : vector<1x384x128xf32> to vector<384x128xf32>
    %cst_41 = arith.constant dense<0.000000e+00> : vector<10x128xf32>
    %77 = tpu.matmul %74, %76, %cst_41 {dimension_numbers = #tpu.dot_dimension_numbers<[1], [0], [0], [1], [0, 0, 1, 1], [], []>} : vector<10x384xf32>, vector<384x128xf32>, vector<10x128xf32> -> vector<10x128xf32>
    %c5_42 = arith.constant 5 : index
    %c0_43 = arith.constant 0 : index
    %c0_44 = arith.constant 0 : index
    %78 = vector.load %arg3[%c5_42, %c0_43, %c0_44] : memref<6x1x128xf32, #tpu.memory_space<vmem>>, vector<1x1x128xf32>
    %79 = vector.shape_cast %78 : vector<1x1x128xf32> to vector<1x128xf32>
    %80 = vector.broadcast %79 : vector<1x128xf32> to vector<10x128xf32>
    %81 = arith.addf %77, %80 : vector<10x128xf32>
    %cst_45 = arith.constant 0.000000e+00 : f32
    %82 = vector.broadcast %cst_45 : f32 to vector<10x128xf32>
    %83 = arith.maximumf %81, %82 : vector<10x128xf32>
    %cst_46 = arith.constant dense<0xFF800000> : vector<128xf32>
    %84 = vector.multi_reduction <maximumf>, %83, %cst_46 [0] : vector<10x128xf32> to vector<128xf32>
    %85 = vector.shape_cast %84 : vector<128xf32> to vector<1x128xf32>
    %86 = tpu.concatenate %16, %44, %85 in 1 : vector<1x128xf32>, vector<1x128xf32>, vector<1x128xf32> -> vector<1x384xf32>
    %c0_47 = arith.constant 0 : index
    %c0_48 = arith.constant 0 : index
    %87 = vector.load %arg4[%c0_47, %c0_48] : memref<384x128xf32, #tpu.memory_space<vmem>>, vector<384x128xf32>
    %cst_49 = arith.constant dense<0.000000e+00> : vector<1x128xf32>
    %88 = tpu.matmul %86, %87, %cst_49 {dimension_numbers = #tpu.dot_dimension_numbers<[1], [0], [0], [1], [0, 0, 1, 1], [], []>} : vector<1x384xf32>, vector<384x128xf32>, vector<1x128xf32> -> vector<1x128xf32>
    %c0_50 = arith.constant 0 : index
    %c0_51 = arith.constant 0 : index
    %89 = vector.load %arg5[%c0_50, %c0_51] : memref<1x128xf32, #tpu.memory_space<vmem>>, vector<1x128xf32>
    %90 = arith.addf %88, %89 : vector<1x128xf32>
    %c0_52 = arith.constant 0 : index
    %c0_53 = arith.constant 0 : index
    %c0_54 = arith.constant 0 : index
    %91 = vector.load %arg6[%c0_52, %c0_53, %c0_54] : memref<1x1x128xf32, #tpu.memory_space<vmem>>, vector<1x1x128xf32>
    %92 = vector.shape_cast %91 : vector<1x1x128xf32> to vector<1x128xf32>
    %93 = vector.shape_cast %90 : vector<1x128xf32> to vector<1x1x128xf32>
    tpu.vector_store %arg6[%c0_52, %c0_53, %c0_54], %93 {strides = array<i32>} : memref<1x1x128xf32, #tpu.memory_space<vmem>>, vector<1x1x128xf32>,
    return
  }
  func.func @transform_0(%arg0: i32) -> (i32, i32, i32) {
    %c0_i32 = arith.constant 0 : i32
    %c0_i32_0 = arith.constant 0 : i32
    %c0_i32_1 = arith.constant 0 : i32
    return %arg0, %c0_i32, %c0_i32_0 : i32, i32, i32
  }
  func.func @transform_1(%arg0: i32) -> (i32, i32, i32) {
    %c0_i32 = arith.constant 0 : i32
    %c0_i32_0 = arith.constant 0 : i32
    %c0_i32_1 = arith.constant 0 : i32
    %c0_i32_2 = arith.constant 0 : i32
    return %c0_i32, %c0_i32_0, %c0_i32_1 : i32, i32, i32
  }
  func.func @transform_2(%arg0: i32) -> (i32, i32, i32) {
    %c0_i32 = arith.constant 0 : i32
    %c0_i32_0 = arith.constant 0 : i32
    %c0_i32_1 = arith.constant 0 : i32
    %c0_i32_2 = arith.constant 0 : i32
    return %c0_i32, %c0_i32_0, %c0_i32_1 : i32, i32, i32
  }
  func.func @transform_3(%arg0: i32) -> (i32, i32) {
    %c0_i32 = arith.constant 0 : i32
    %c0_i32_0 = arith.constant 0 : i32
    %c0_i32_1 = arith.constant 0 : i32
    return %c0_i32, %c0_i32_0 : i32, i32
  }
  func.func @transform_4(%arg0: i32) -> (i32, i32) {
    %c0_i32 = arith.constant 0 : i32
    %c0_i32_0 = arith.constant 0 : i32
    %c0_i32_1 = arith.constant 0 : i32
    return %c0_i32, %c0_i32_0 : i32, i32
  }
  func.func @transform_5(%arg0: i32) -> (i32, i32, i32) {
    %c0_i32 = arith.constant 0 : i32
    %c0_i32_0 = arith.constant 0 : i32
    %c0_i32_1 = arith.constant 0 : i32
    return %arg0, %c0_i32, %c0_i32_0 : i32, i32, i32
  }
}

</mosaic_0001>

<llo_original>
// kernel: target_representation.1
$region0: #{target_representation.1}
  #allocation0 [shape = 'u32[]', space=smem, size = 0x4, offset = 0x4, fixed_abs, tag = 'smem constant byte address 0x4 - core index']
  #allocation1 [shape = 'u32[72,128]{1,0:T(1,128)}', space=vmem, size = 0x9000, scoped, tag = 'internal scratch']
  %s0 = inlined_call_operand.vmem [shape: f32[2,16,128], index: 0, kind: input, shape index: {}]
  %s1 = inlined_call_operand.vmem [shape: f32[6,384,128], index: 1, kind: input, shape index: {}]
  %s2 = inlined_call_operand.vmem [shape: f32[6,1,128], index: 2, kind: input, shape index: {}]
  %s3 = inlined_call_operand.vmem [shape: f32[384,128], index: 3, kind: input, shape index: {}]
  %s4 = inlined_call_operand.vmem [shape: f32[1,128], index: 4, kind: input, shape index: {}]
  %s5 = inlined_call_operand.hbm [shape: f32[2,1,128], index: 5, kind: output, shape index: {}]
  %s6 = sld [smem:[#allocation0]]
  $region53: #{target_representation.1} parent=0
    _
  %s8 = ssub.s32 1, %s6
  %s9 = scalar_select 0, %s8, %s6
  $region1: #{target_representation.1} parent=0
    #allocation2 [shape = 'u8[1024]{0}', space=vmem, size = 0x400, scoped, tag = 'output window, operand 0']
    #allocation3 [shape = 's32[2]{0}', space=sflag, size = 0x8, scoped, tag = 'scoped memory for target_representation.1']
    %10 = vsyncpa [#allocation3], 0
    %s11 = scalar_lea.sflag [#allocation3], 1
    %12 = vsyncpa %s11, 0
    loop: start=0, step=1, limit=4
    $region2: #{target_representation.1} parent=1 // loop_pre_header
      _
    $region3: #{target_representation.1} parent=1 // loop_header
      %s14 = sphi 0, %s18
      %p15 = scmp.ge.s32.totalorder %s14, 4
      %s24 = sphi 0, %s26
      %s27 = sphi 0, %s24
      %s28 = sphi 0, %s27
      %s44 = sphi 0, %s28
      %s48 = sphi 0, %s48
      %s50 = sphi 0, %s48
      %s51 = sphi 0, %s50
      %s65 = sphi 0, %s51
      %s69 = sphi 0, %s69
      %s71 = sphi 0, %s69
      %s72 = sphi 0, %s71
      %s86 = sphi 0, %s72
      %s90 = sphi 0, %s90
      %s92 = sphi 0, %s90
      %s93 = sphi 0, %s92
      %s107 = sphi 0, %s93
      %s111 = sphi 0, %s111
      %s113 = sphi 0, %s111
      %s114 = sphi 0, %s113
      %s128 = sphi 0, %s114
      %s134 = sphi 0, %s136
      %s137 = sphi 0, %s134
      %s138 = sphi 0, %s137
      %s154 = sphi 0, %s138
    $region4: #{target_representation.1} parent=1 // loop_header_branch
      %17 = sbr.rel (%p15) target = $region8
    $region5: #{target_representation.1} parent=1 // loop_body
      %s19 = ssub.s32 %s14, 1
      %s20 = ssub.s32 %s14, 2
      %s21 = sadd.s32 %s14, 1
      %s22 = ssub.s32 %s14, %s21
      %p23 = scmp.eq.s32.totalorder %s22, 0
      %s25 = sadd.s32 %s24, 1
      %s26 = scalar_select %p23, %s24, %s25
      %p29 = pneg %p23
      %p30 = scmp.eq.s32.totalorder %s14, 1
      %p31 = por %p29, %p30
      %p32 = scmp.ne.s32.totalorder %s24, %s27
      %p33 = scmp.eq.s32.totalorder %s14, 0
      %p34 = por %p32, %p33
      %p35 = scmp.ne.s32.totalorder %s24, %s27
      %p36 = scmp.eq.s32.totalorder %s19, 1
      %p37 = por %p35, %p36
      %p38 = scmp.ne.s32.totalorder %s27, %s28
      %p39 = scmp.eq.s32.totalorder %s19, 0
      %p40 = por %p38, %p39
      %p41 = scmp.ne.s32.totalorder %s27, %s28
      %p42 = scmp.eq.s32.totalorder %s20, 1
      %p43 = por %p41, %p42
      %p45 = scmp.ne.s32.totalorder %s28, %s44
      %p46 = scmp.eq.s32.totalorder %s20, 0
      %p47 = por %p45, %p46
      %s49 = sadd.s32 %s48, 1
      %p52 = scmp.eq.s32.totalorder %s14, 1
      %p53 = scmp.ne.s32.totalorder %s48, %s50
      %p54 = scmp.eq.s32.totalorder %s14, 0
      %p55 = por %p53, %p54
      %p56 = scmp.ne.s32.totalorder %s48, %s50
      %p57 = scmp.eq.s32.totalorder %s19, 1
      %p58 = por %p56, %p57
      %p59 = scmp.ne.s32.totalorder %s50, %s51
      %p60 = scmp.eq.s32.totalorder %s19, 0
      %p61 = por %p59, %p60
      %p62 = scmp.ne.s32.totalorder %s50, %s51
      %p63 = scmp.eq.s32.totalorder %s20, 1
      %p64 = por %p62, %p63
      %p66 = scmp.ne.s32.totalorder %s51, %s65
      %p67 = scmp.eq.s32.totalorder %s20, 0
      %p68 = por %p66, %p67
      %s70 = sadd.s32 %s69, 1
      %p73 = scmp.eq.s32.totalorder %s14, 1
      %p74 = scmp.ne.s32.totalorder %s69, %s71
      %p75 = scmp.eq.s32.totalorder %s14, 0
      %p76 = por %p74, %p75
      %p77 = scmp.ne.s32.totalorder %s69, %s71
      %p78 = scmp.eq.s32.totalorder %s19, 1
      %p79 = por %p77, %p78
      %p80 = scmp.ne.s32.totalorder %s71, %s72
      %p81 = scmp.eq.s32.totalorder %s19, 0
      %p82 = por %p80, %p81
      %p83 = scmp.ne.s32.totalorder %s71, %s72
      %p84 = scmp.eq.s32.totalorder %s20, 1
      %p85 = por %p83, %p84
      %p87 = scmp.ne.s32.totalorder %s72, %s86
      %p88 = scmp.eq.s32.totalorder %s20, 0
      %p89 = por %p87, %p88
      %s91 = sadd.s32 %s90, 1
      %p94 = scmp.eq.s32.totalorder %s14, 1
      %p95 = scmp.ne.s32.totalorder %s90, %s92
      %p96 = scmp.eq.s32.totalorder %s14, 0
      %p97 = por %p95, %p96
      %p98 = scmp.ne.s32.totalorder %s90, %s92
      %p99 = scmp.eq.s32.totalorder %s19, 1
      %p100 = por %p98, %p99
      %p101 = scmp.ne.s32.totalorder %s92, %s93
      %p102 = scmp.eq.s32.totalorder %s19, 0
      %p103 = por %p101, %p102
      %p104 = scmp.ne.s32.totalorder %s92, %s93
      %p105 = scmp.eq.s32.totalorder %s20, 1
      %p106 = por %p104, %p105
      %p108 = scmp.ne.s32.totalorder %s93, %s107
      %p109 = scmp.eq.s32.totalorder %s20, 0
      %p110 = por %p108, %p109
      %s112 = sadd.s32 %s111, 1
      %p115 = scmp.eq.s32.totalorder %s14, 1
      %p116 = scmp.ne.s32.totalorder %s111, %s113
      %p117 = scmp.eq.s32.totalorder %s14, 0
      %p118 = por %p116, %p117
      %p119 = scmp.ne.s32.totalorder %s111, %s113
      %p120 = scmp.eq.s32.totalorder %s19, 1
      %p121 = por %p119, %p120
      %p122 = scmp.ne.s32.totalorder %s113, %s114
      %p123 = scmp.eq.s32.totalorder %s19, 0
      %p124 = por %p122, %p123
      %p125 = scmp.ne.s32.totalorder %s113, %s114
      %p126 = scmp.eq.s32.totalorder %s20, 1
      %p127 = por %p125, %p126
      %p129 = scmp.ne.s32.totalorder %s114, %s128
      %p130 = scmp.eq.s32.totalorder %s20, 0
      %p131 = por %p129, %p130
      %s132 = ssub.s32 %s14, %s21
      %p133 = scmp.eq.s32.totalorder %s132, 0
      %s135 = sadd.s32 %s134, 1
      %s136 = scalar_select %p133, %s134, %s135
      %p139 = pneg %p133
      %p140 = scmp.eq.s32.totalorder %s14, 1
      %p141 = por %p139, %p140
      %p142 = scmp.ne.s32.totalorder %s134, %s137
      %p143 = scmp.eq.s32.totalorder %s14, 0
      %p144 = por %p142, %p143
      %p145 = scmp.ne.s32.totalorder %s134, %s137
      %p146 = scmp.eq.s32.totalorder %s19, 1
      %p147 = por %p145, %p146
      %p148 = scmp.ne.s32.totalorder %s137, %s138
      %p149 = scmp.eq.s32.totalorder %s19, 0
      %p150 = por %p148, %p149
      %p151 = scmp.ne.s32.totalorder %s137, %s138
      %p152 = scmp.eq.s32.totalorder %s20, 1
      %p153 = por %p151, %p152
      %p155 = scmp.ne.s32.totalorder %s138, %s154
      %p156 = scmp.eq.s32.totalorder %s20, 0
      %p157 = por %p155, %p156
      %p158 = scmp.le.s32.totalorder 1, %s14
      %p159 = scmp.lt.s32.totalorder %s14, 3
      %p160 = pnand %p158, %p159
      %p161 = pneg %p160
      // Predicated region
      $region9: #{target_representation.1} parent=5 // pred_check
        _
      $region10: #{target_representation.1} parent=5 // pred_check_branch
        %163 = sbr.rel (%p160) target = $region12
      $region11: #{target_representation.1} parent=5 // pred_region
        %s164 = ssub.s32 %s14, 1
        // Predicated region
        $region13: #{target_representation.1} parent=11 // pred_check
          %p165 = pneg %p61
        $region14: #{target_representation.1} parent=11 // pred_check_branch
          %167 = sbr.rel (%p165) target = $region16
        $region15: #{target_representation.1} parent=11 // pred_region
          _
        $region16: #{target_representation.1} parent=11 // pred_fallthru
          _
        // Predicated region
        $region17: #{target_representation.1} parent=11 // pred_check
          %p168 = pneg %p82
        $region18: #{target_representation.1} parent=11 // pred_check_branch
          %170 = sbr.rel (%p168) target = $region20
        $region19: #{target_representation.1} parent=11 // pred_region
          _
        $region20: #{target_representation.1} parent=11 // pred_fallthru
          _
        // Predicated region
        $region21: #{target_representation.1} parent=11 // pred_check
          %p171 = pneg %p103
        $region22: #{target_representation.1} parent=11 // pred_check_branch
          %173 = sbr.rel (%p171) target = $region24
        $region23: #{target_representation.1} parent=11 // pred_region
          _
        $region24: #{target_representation.1} parent=11 // pred_fallthru
          _
        // Predicated region
        $region25: #{target_representation.1} parent=11 // pred_check
          %p174 = pneg %p124
        $region26: #{target_representation.1} parent=11 // pred_check_branch
          %176 = sbr.rel (%p174) target = $region28
        $region27: #{target_representation.1} parent=11 // pred_region
          _
        $region28: #{target_representation.1} parent=11 // pred_fallthru
          _
      $region12: #{target_representation.1} parent=5 // pred_fallthru
        _
      %p177 = scmp.lt.s32.totalorder %s14, 2
      // Predicated region
      $region29: #{target_representation.1} parent=5 // pred_check
        %p178 = pneg %p177
      $region30: #{target_representation.1} parent=5 // pred_check_branch
        %180 = sbr.rel (%p178) target = $region32
      $region31: #{target_representation.1} parent=5 // pred_region
        // Predicated region
        $region33: #{target_representation.1} parent=31 // pred_check
          %p181 = pneg %p34
        $region34: #{target_representation.1} parent=31 // pred_check_branch
          %183 = sbr.rel (%p181) target = $region36
        $region35: #{target_representation.1} parent=31 // pred_region
          %p184 = scmp.lt.s32.totalorder %s14, 1
          %s185 = scalar_select %p184, %s14, 1
          %s186 = smul.addr %s185, 2
          %s187 = smul.addr %s186, 8
          %s188 = scalar_lea.vmem %s0, %s187
        $region36: #{target_representation.1} parent=31 // pred_fallthru
          _
      $region32: #{target_representation.1} parent=5 // pred_fallthru
        _
      %p189 = scmp.le.s32.totalorder 1, %s14
      %p190 = scmp.lt.s32.totalorder %s14, 3
      %p191 = pnand %p189, %p190
      %p192 = pneg %p191
      // Predicated region
      $region37: #{target_representation.1} parent=5 // pred_check
        _
      $region38: #{target_representation.1} parent=5 // pred_check_branch
        %194 = sbr.rel (%p191) target = $region40
      $region39: #{target_representation.1} parent=5 // pred_region
        %s195 = ssub.s32 %s14, 1
        %p196 = scmp.lt.s32.totalorder %s19, 1
        %s197 = scalar_select %p196, %s19, 1
        %s198 = smul.addr %s197, 2
        %s199 = smul.addr %s198, 8
        %s200 = scalar_lea.vmem %s0, %s199
        %p201 = pneg %p40
        %p202 = pneg %p37
        %p203 = pneg %p61
        %p204 = pneg %p58
        %p205 = pneg %p82
        %p206 = pneg %p79
        %p207 = pneg %p103
        %p208 = pneg %p100
        %p209 = pneg %p124
        %p210 = pneg %p121
        %p211 = pneg %p150
        %p212 = pneg %p147
        %s213 = sand.u32 %s137, 1
        %s214 = scalar_lea.sflag [#allocation3], %s213
        %s215 = sand.u32 %s137, 1
        %s216 = scalar_lea.vmem [#allocation2], %s215
        %p217 = scmp.lt.s32.totalorder %s19, 1
        %s218 = scalar_select %p217, %s19, 1
        %s219 = smul.addr %s218, 2
        %s220 = smul.addr %s219, 8
        %s221 = scalar_lea.vmem %s0, %s220
        %v222 = vld [vmem:[%s221] sm:$0xff]
        %v223 = vld [vmem:[%s221 + $0x8] sm:$0xff]
        %vm226 = vcmask 1046528
        %v227 = vrot.slane %v222, 1
        %v228 = vrot.slane %v223, 1
        %v229 = vsel %vm226, %v227, %v228
        %vm232 = vcmask 1045504
        %v233 = vrot.slane %v222, 2
        %v234 = vrot.slane %v223, 2
        %v235 = vsel %vm232, %v233, %v234
        %v238 = vld [vmem:[%s1] sm:$0xff]
        %v239 = vld [vmem:[%s1 + $0x8] sm:$0xff]
        %v240 = vld [vmem:[%s1 + $0x10] sm:$0xff]
        %v241 = vld [vmem:[%s1 + $0x18] sm:$0xff]
        %v242 = vld [vmem:[%s1 + $0x20] sm:$0xff]
        %v243 = vld [vmem:[%s1 + $0x28] sm:$0xff]
        %v244 = vld [vmem:[%s1 + $0x30] sm:$0xff]
        %v245 = vld [vmem:[%s1 + $0x38] sm:$0xff]
        %v246 = vld [vmem:[%s1 + $0x40] sm:$0xff]
        %v247 = vld [vmem:[%s1 + $0x48] sm:$0xff]
        %v248 = vld [vmem:[%s1 + $0x50] sm:$0xff]
        %v249 = vld [vmem:[%s1 + $0x58] sm:$0xff]
        %v250 = vld [vmem:[%s1 + $0x60] sm:$0xff]
        %v251 = vld [vmem:[%s1 + $0x68] sm:$0xff]
        %v252 = vld [vmem:[%s1 + $0x70] sm:$0xff]
        %v253 = vld [vmem:[%s1 + $0x78] sm:$0xff]
        %v254 = vld [vmem:[%s1 + $0x80] sm:$0xff]
        %v255 = vld [vmem:[%s1 + $0x88] sm:$0xff]
        %v256 = vld [vmem:[%s1 + $0x90] sm:$0xff]
        %v257 = vld [vmem:[%s1 + $0x98] sm:$0xff]
        %v258 = vld [vmem:[%s1 + $0xa0] sm:$0xff]
        %v259 = vld [vmem:[%s1 + $0xa8] sm:$0xff]
        %v260 = vld [vmem:[%s1 + $0xb0] sm:$0xff]
        %v261 = vld [vmem:[%s1 + $0xb8] sm:$0xff]
        %v262 = vld [vmem:[%s1 + $0xc0] sm:$0xff]
        %v263 = vld [vmem:[%s1 + $0xc8] sm:$0xff]
        %v264 = vld [vmem:[%s1 + $0xd0] sm:$0xff]
        %v265 = vld [vmem:[%s1 + $0xd8] sm:$0xff]
        %v266 = vld [vmem:[%s1 + $0xe0] sm:$0xff]
        %v267 = vld [vmem:[%s1 + $0xe8] sm:$0xff]
        %v268 = vld [vmem:[%s1 + $0xf0] sm:$0xff]
        %v269 = vld [vmem:[%s1 + $0xf8] sm:$0xff]
        %v270 = vld [vmem:[%s1 + $0x100] sm:$0xff]
        %v271 = vld [vmem:[%s1 + $0x108] sm:$0xff]
        %v272 = vld [vmem:[%s1 + $0x110] sm:$0xff]
        %v273 = vld [vmem:[%s1 + $0x118] sm:$0xff]
        %v274 = vld [vmem:[%s1 + $0x120] sm:$0xff]
        %v275 = vld [vmem:[%s1 + $0x128] sm:$0xff]
        %v276 = vld [vmem:[%s1 + $0x130] sm:$0xff]
        %v277 = vld [vmem:[%s1 + $0x138] sm:$0xff]
        %v278 = vld [vmem:[%s1 + $0x140] sm:$0xff]
        %v279 = vld [vmem:[%s1 + $0x148] sm:$0xff]
        %v280 = vld [vmem:[%s1 + $0x150] sm:$0xff]
        %v281 = vld [vmem:[%s1 + $0x158] sm:$0xff]
        %v282 = vld [vmem:[%s1 + $0x160] sm:$0xff]
        %v283 = vld [vmem:[%s1 + $0x168] sm:$0xff]
        %v284 = vld [vmem:[%s1 + $0x170] sm:$0xff]
        %v285 = vld [vmem:[%s1 + $0x178] sm:$0xff]
        %v286 = vld [vmem:[%s2] sm:$0x1]
        %v288 = vperm.slane %v286, 0
        %290 = vmatpush.msra.mxu0 %v253
        %291 = vmatpush.msra.mxu0 %v252
        %292 = vmatpush.msra.mxu0 %v251
        %293 = vmatpush.msra.mxu0 %v250
        %294 = vmatpush.msra.mxu0 %v249
        %295 = vmatpush.msra.mxu0 %v248
        %296 = vmatpush.msra.mxu0 %v247
        %297 = vmatpush.msra.mxu0 %v246
        %298 = vmatpush.msra.mxu0 %v245
        %299 = vmatpush.msra.mxu0 %v244
        %300 = vmatpush.msra.mxu0 %v243
        %301 = vmatpush.msra.mxu0 %v242
        %302 = vmatpush.msra.mxu0 %v241
        %303 = vmatpush.msra.mxu0 %v240
        %304 = vmatpush.msra.mxu0 %v239
        %305 = vmatpush.msra.mxu0 %v238
        %306 = vmatmul.f32.gmra.mxu0 %v222
        %v307 = vpop.f32.mrf.mxu0
        %v308 = vadd.f32 %v288, %v307
        %309 = vmatmul.f32.gmra.mxu0 %v223
        %v310 = vpop.f32.mrf.mxu0
        %v311 = vadd.f32 %v288, %v310
        %312 = vdwg.mxu0
        %313 = vmatpush.msra.mxu0 %v269
        %314 = vmatpush.msra.mxu0 %v268
        %315 = vmatpush.msra.mxu0 %v267
        %316 = vmatpush.msra.mxu0 %v266
        %317 = vmatpush.msra.mxu0 %v265
        %318 = vmatpush.msra.mxu0 %v264
        %319 = vmatpush.msra.mxu0 %v263
        %320 = vmatpush.msra.mxu0 %v262
        %321 = vmatpush.msra.mxu0 %v261
        %322 = vmatpush.msra.mxu0 %v260
        %323 = vmatpush.msra.mxu0 %v259
        %324 = vmatpush.msra.mxu0 %v258
        %325 = vmatpush.msra.mxu0 %v257
        %326 = vmatpush.msra.mxu0 %v256
        %327 = vmatpush.msra.mxu0 %v255
        %328 = vmatpush.msra.mxu0 %v254
        %329 = vmatmul.f32.gmra.mxu0 %v229
        %v330 = vpop.f32.mrf.mxu0
        %v331 = vadd.f32 %v308, %v330
        %332 = vmatmul.f32.gmra.mxu0 %v228
        %v333 = vpop.f32.mrf.mxu0
        %v334 = vadd.f32 %v311, %v333
        %335 = vdwg.mxu0
        %336 = vmatpush.msra.mxu0 %v285
        %337 = vmatpush.msra.mxu0 %v284
        %338 = vmatpush.msra.mxu0 %v283
        %339 = vmatpush.msra.mxu0 %v282
        %340 = vmatpush.msra.mxu0 %v281
        %341 = vmatpush.msra.mxu0 %v280
        %342 = vmatpush.msra.mxu0 %v279
        %343 = vmatpush.msra.mxu0 %v278
        %344 = vmatpush.msra.mxu0 %v277
        %345 = vmatpush.msra.mxu0 %v276
        %346 = vmatpush.msra.mxu0 %v275
        %347 = vmatpush.msra.mxu0 %v274
        %348 = vmatpush.msra.mxu0 %v273
        %349 = vmatpush.msra.mxu0 %v272
        %350 = vmatpush.msra.mxu0 %v271
        %351 = vmatpush.msra.mxu0 %v270
        %352 = vmatmul.f32.gmra.mxu0 %v235
        %v353 = vpop.f32.mrf.mxu0
        %v354 = vadd.f32 %v331, %v353
        %355 = vmatmul.f32.gmra.mxu0 %v234
        %v356 = vpop.f32.mrf.mxu0
        %v357 = vadd.f32 %v334, %v356
        %358 = vdwg.mxu0
        %v359 = vmax.f32 %v354, 0.0
        %v360 = vmax.f32 %v357, 0.0
        %v361 = vsel %vm232, %v360, -inf
        %v362 = vmax.f32 %v359, %v361
        %v363 = vrot.slane %v362, 4
        %v364 = vmax.f32 %v362, %v363
        %v365 = vrot.slane %v364, 2
        %v366 = vmax.f32 %v364, %v365
        %v367 = vrot.slane %v366, 1
        %v368 = vmax.f32 %v366, %v367
        %s369 = scalar_lea.vmem %s1, 384
        %v370 = vld [vmem:[%s369] sm:$0xff]
        %v371 = vld [vmem:[%s369 + $0x8] sm:$0xff]
        %v372 = vld [vmem:[%s369 + $0x10] sm:$0xff]
        %v373 = vld [vmem:[%s369 + $0x18] sm:$0xff]
        %v374 = vld [vmem:[%s369 + $0x20] sm:$0xff]
        %v375 = vld [vmem:[%s369 + $0x28] sm:$0xff]
        %v376 = vld [vmem:[%s369 + $0x30] sm:$0xff]
        %v377 = vld [vmem:[%s369 + $0x38] sm:$0xff]
        %v378 = vld [vmem:[%s369 + $0x40] sm:$0xff]
        %v379 = vld [vmem:[%s369 + $0x48] sm:$0xff]
        %v380 = vld [vmem:[%s369 + $0x50] sm:$0xff]
        %v381 = vld [vmem:[%s369 + $0x58] sm:$0xff]
        %v382 = vld [vmem:[%s369 + $0x60] sm:$0xff]
        %v383 = vld [vmem:[%s369 + $0x68] sm:$0xff]
        %v384 = vld [vmem:[%s369 + $0x70] sm:$0xff]
        %v385 = vld [vmem:[%s369 + $0x78] sm:$0xff]
        %v386 = vld [vmem:[%s369 + $0x80] sm:$0xff]
        %v387 = vld [vmem:[%s369 + $0x88] sm:$0xff]
        %v388 = vld [vmem:[%s369 + $0x90] sm:$0xff]
        %v389 = vld [vmem:[%s369 + $0x98] sm:$0xff]
        %v390 = vld [vmem:[%s369 + $0xa0] sm:$0xff]
        %v391 = vld [vmem:[%s369 + $0xa8] sm:$0xff]
        %v392 = vld [vmem:[%s369 + $0xb0] sm:$0xff]
        %v393 = vld [vmem:[%s369 + $0xb8] sm:$0xff]
        %v394 = vld [vmem:[%s369 + $0xc0] sm:$0xff]
        %v395 = vld [vmem:[%s369 + $0xc8] sm:$0xff]
        %v396 = vld [vmem:[%s369 + $0xd0] sm:$0xff]
        %v397 = vld [vmem:[%s369 + $0xd8] sm:$0xff]
        %v398 = vld [vmem:[%s369 + $0xe0] sm:$0xff]
        %v399 = vld [vmem:[%s369 + $0xe8] sm:$0xff]
        %v400 = vld [vmem:[%s369 + $0xf0] sm:$0xff]
        %v401 = vld [vmem:[%s369 + $0xf8] sm:$0xff]
        %v402 = vld [vmem:[%s369 + $0x100] sm:$0xff]
        %v403 = vld [vmem:[%s369 + $0x108] sm:$0xff]
        %v404 = vld [vmem:[%s369 + $0x110] sm:$0xff]
        %v405 = vld [vmem:[%s369 + $0x118] sm:$0xff]
        %v406 = vld [vmem:[%s369 + $0x120] sm:$0xff]
        %v407 = vld [vmem:[%s369 + $0x128] sm:$0xff]
        %v408 = vld [vmem:[%s369 + $0x130] sm:$0xff]
        %v409 = vld [vmem:[%s369 + $0x138] sm:$0xff]
        %v410 = vld [vmem:[%s369 + $0x140] sm:$0xff]
        %v411 = vld [vmem:[%s369 + $0x148] sm:$0xff]
        %v412 = vld [vmem:[%s369 + $0x150] sm:$0xff]
        %v413 = vld [vmem:[%s369 + $0x158] sm:$0xff]
        %v414 = vld [vmem:[%s369 + $0x160] sm:$0xff]
        %v415 = vld [vmem:[%s369 + $0x168] sm:$0xff]
        %v416 = vld [vmem:[%s369 + $0x170] sm:$0xff]
        %v417 = vld [vmem:[%s369 + $0x178] sm:$0xff]
        %s418 = scalar_lea.vmem %s2, 1
        %v419 = vld [vmem:[%s418] sm:$0x1]
        %v421 = vperm.slane %v419, 0
        %423 = vmatpush.msra.mxu0 %v385
        %424 = vmatpush.msra.mxu0 %v384
        %425 = vmatpush.msra.mxu0 %v383
        %426 = vmatpush.msra.mxu0 %v382
        %427 = vmatpush.msra.mxu0 %v381
        %428 = vmatpush.msra.mxu0 %v380
        %429 = vmatpush.msra.mxu0 %v379
        %430 = vmatpush.msra.mxu0 %v378
        %431 = vmatpush.msra.mxu0 %v377
        %432 = vmatpush.msra.mxu0 %v376
        %433 = vmatpush.msra.mxu0 %v375
        %434 = vmatpush.msra.mxu0 %v374
        %435 = vmatpush.msra.mxu0 %v373
        %436 = vmatpush.msra.mxu0 %v372
        %437 = vmatpush.msra.mxu0 %v371
        %438 = vmatpush.msra.mxu0 %v370
        %439 = vmatmul.f32.gmra.mxu0 %v222
        %v440 = vpop.f32.mrf.mxu0
        %v441 = vadd.f32 %v421, %v440
        %442 = vmatmul.f32.gmra.mxu0 %v223
        %v443 = vpop.f32.mrf.mxu0
        %v444 = vadd.f32 %v421, %v443
        %445 = vdwg.mxu0
        %446 = vmatpush.msra.mxu0 %v401
        %447 = vmatpush.msra.mxu0 %v400
        %448 = vmatpush.msra.mxu0 %v399
        %449 = vmatpush.msra.mxu0 %v398
        %450 = vmatpush.msra.mxu0 %v397
        %451 = vmatpush.msra.mxu0 %v396
        %452 = vmatpush.msra.mxu0 %v395
        %453 = vmatpush.msra.mxu0 %v394
        %454 = vmatpush.msra.mxu0 %v393
        %455 = vmatpush.msra.mxu0 %v392
        %456 = vmatpush.msra.mxu0 %v391
        %457 = vmatpush.msra.mxu0 %v390
        %458 = vmatpush.msra.mxu0 %v389
        %459 = vmatpush.msra.mxu0 %v388
        %460 = vmatpush.msra.mxu0 %v387
        %461 = vmatpush.msra.mxu0 %v386
        %462 = vmatmul.f32.gmra.mxu0 %v229
        %v463 = vpop.f32.mrf.mxu0
        %v464 = vadd.f32 %v441, %v463
        %465 = vmatmul.f32.gmra.mxu0 %v228
        %v466 = vpop.f32.mrf.mxu0
        %v467 = vadd.f32 %v444, %v466
        %468 = vdwg.mxu0
        %469 = vmatpush.msra.mxu0 %v417
        %470 = vmatpush.msra.mxu0 %v416
        %471 = vmatpush.msra.mxu0 %v415
        %472 = vmatpush.msra.mxu0 %v414
        %473 = vmatpush.msra.mxu0 %v413
        %474 = vmatpush.msra.mxu0 %v412
        %475 = vmatpush.msra.mxu0 %v411
        %476 = vmatpush.msra.mxu0 %v410
        %477 = vmatpush.msra.mxu0 %v409
        %478 = vmatpush.msra.mxu0 %v408
        %479 = vmatpush.msra.mxu0 %v407
        %480 = vmatpush.msra.mxu0 %v406
        %481 = vmatpush.msra.mxu0 %v405
        %482 = vmatpush.msra.mxu0 %v404
        %483 = vmatpush.msra.mxu0 %v403
        %484 = vmatpush.msra.mxu0 %v402
        %485 = vmatmul.f32.gmra.mxu0 %v235
        %v486 = vpop.f32.mrf.mxu0
        %v487 = vadd.f32 %v464, %v486
        %488 = vmatmul.f32.gmra.mxu0 %v234
        %v489 = vpop.f32.mrf.mxu0
        %v490 = vadd.f32 %v467, %v489
        %491 = vdwg.mxu0
        %v492 = vmax.f32 %v487, 0.0
        %v493 = vmax.f32 %v490, 0.0
        %v496 = vrot.slane %v492, 1
        %v497 = vrot.slane %v493, 1
        %v498 = vsel %vm226, %v496, %v497
        %v501 = vrot.slane %v492, 2
        %v502 = vrot.slane %v493, 2
        %v503 = vsel %vm232, %v501, %v502
        %s506 = scalar_lea.vmem %s1, 768
        %v507 = vld [vmem:[%s506] sm:$0xff]
        %v508 = vld [vmem:[%s506 + $0x8] sm:$0xff]
        %v509 = vld [vmem:[%s506 + $0x10] sm:$0xff]
        %v510 = vld [vmem:[%s506 + $0x18] sm:$0xff]
        %v511 = vld [vmem:[%s506 + $0x20] sm:$0xff]
        %v512 = vld [vmem:[%s506 + $0x28] sm:$0xff]
        %v513 = vld [vmem:[%s506 + $0x30] sm:$0xff]
        %v514 = vld [vmem:[%s506 + $0x38] sm:$0xff]
        %v515 = vld [vmem:[%s506 + $0x40] sm:$0xff]
        %v516 = vld [vmem:[%s506 + $0x48] sm:$0xff]
        %v517 = vld [vmem:[%s506 + $0x50] sm:$0xff]
        %v518 = vld [vmem:[%s506 + $0x58] sm:$0xff]
        %v519 = vld [vmem:[%s506 + $0x60] sm:$0xff]
        %v520 = vld [vmem:[%s506 + $0x68] sm:$0xff]
        %v521 = vld [vmem:[%s506 + $0x70] sm:$0xff]
        %v522 = vld [vmem:[%s506 + $0x78] sm:$0xff]
        %v523 = vld [vmem:[%s506 + $0x80] sm:$0xff]
        %v524 = vld [vmem:[%s506 + $0x88] sm:$0xff]
        %v525 = vld [vmem:[%s506 + $0x90] sm:$0xff]
        %v526 = vld [vmem:[%s506 + $0x98] sm:$0xff]
        %v527 = vld [vmem:[%s506 + $0xa0] sm:$0xff]
        %v528 = vld [vmem:[%s506 + $0xa8] sm:$0xff]
        %v529 = vld [vmem:[%s506 + $0xb0] sm:$0xff]
        %v530 = vld [vmem:[%s506 + $0xb8] sm:$0xff]
        %v531 = vld [vmem:[%s506 + $0xc0] sm:$0xff]
        %v532 = vld [vmem:[%s506 + $0xc8] sm:$0xff]
        %v533 = vld [vmem:[%s506 + $0xd0] sm:$0xff]
        %v534 = vld [vmem:[%s506 + $0xd8] sm:$0xff]
        %v535 = vld [vmem:[%s506 + $0xe0] sm:$0xff]
        %v536 = vld [vmem:[%s506 + $0xe8] sm:$0xff]
        %v537 = vld [vmem:[%s506 + $0xf0] sm:$0xff]
        %v538 = vld [vmem:[%s506 + $0xf8] sm:$0xff]
        %v539 = vld [vmem:[%s506 + $0x100] sm:$0xff]
        %v540 = vld [vmem:[%s506 + $0x108] sm:$0xff]
        %v541 = vld [vmem:[%s506 + $0x110] sm:$0xff]
        %v542 = vld [vmem:[%s506 + $0x118] sm:$0xff]
        %v543 = vld [vmem:[%s506 + $0x120] sm:$0xff]
        %v544 = vld [vmem:[%s506 + $0x128] sm:$0xff]
        %v545 = vld [vmem:[%s506 + $0x130] sm:$0xff]
        %v546 = vld [vmem:[%s506 + $0x138] sm:$0xff]
        %v547 = vld [vmem:[%s506 + $0x140] sm:$0xff]
        %v548 = vld [vmem:[%s506 + $0x148] sm:$0xff]
        %v549 = vld [vmem:[%s506 + $0x150] sm:$0xff]
        %v550 = vld [vmem:[%s506 + $0x158] sm:$0xff]
        %v551 = vld [vmem:[%s506 + $0x160] sm:$0xff]
        %v552 = vld [vmem:[%s506 + $0x168] sm:$0xff]
        %v553 = vld [vmem:[%s506 + $0x170] sm:$0xff]
        %v554 = vld [vmem:[%s506 + $0x178] sm:$0xff]
        %s555 = scalar_lea.vmem %s2, 2
        %v556 = vld [vmem:[%s555] sm:$0x1]
        %v558 = vperm.slane %v556, 0
        %560 = vmatpush.msra.mxu0 %v522
        %561 = vmatpush.msra.mxu0 %v521
        %562 = vmatpush.msra.mxu0 %v520
        %563 = vmatpush.msra.mxu0 %v519
        %564 = vmatpush.msra.mxu0 %v518
        %565 = vmatpush.msra.mxu0 %v517
        %566 = vmatpush.msra.mxu0 %v516
        %567 = vmatpush.msra.mxu0 %v515
        %568 = vmatpush.msra.mxu0 %v514
        %569 = vmatpush.msra.mxu0 %v513
        %570 = vmatpush.msra.mxu0 %v512
        %571 = vmatpush.msra.mxu0 %v511
        %572 = vmatpush.msra.mxu0 %v510
        %573 = vmatpush.msra.mxu0 %v509
        %574 = vmatpush.msra.mxu0 %v508
        %575 = vmatpush.msra.mxu0 %v507
        %576 = vmatmul.f32.gmra.mxu0 %v492
        %v577 = vpop.f32.mrf.mxu0
        %v578 = vadd.f32 %v558, %v577
        %579 = vmatmul.f32.gmra.mxu0 %v493
        %v580 = vpop.f32.mrf.mxu0
        %v581 = vadd.f32 %v558, %v580
        %582 = vdwg.mxu0
        %583 = vmatpush.msra.mxu0 %v538
        %584 = vmatpush.msra.mxu0 %v537
        %585 = vmatpush.msra.mxu0 %v536
        %586 = vmatpush.msra.mxu0 %v535
        %587 = vmatpush.msra.mxu0 %v534
        %588 = vmatpush.msra.mxu0 %v533
        %589 = vmatpush.msra.mxu0 %v532
        %590 = vmatpush.msra.mxu0 %v531
        %591 = vmatpush.msra.mxu0 %v530
        %592 = vmatpush.msra.mxu0 %v529
        %593 = vmatpush.msra.mxu0 %v528
        %594 = vmatpush.msra.mxu0 %v527
        %595 = vmatpush.msra.mxu0 %v526
        %596 = vmatpush.msra.mxu0 %v525
        %597 = vmatpush.msra.mxu0 %v524
        %598 = vmatpush.msra.mxu0 %v523
        %599 = vmatmul.f32.gmra.mxu0 %v498
        %v600 = vpop.f32.mrf.mxu0
        %v601 = vadd.f32 %v578, %v600
        %602 = vmatmul.f32.gmra.mxu0 %v497
        %v603 = vpop.f32.mrf.mxu0
        %v604 = vadd.f32 %v581, %v603
        %605 = vdwg.mxu0
        %606 = vmatpush.msra.mxu0 %v554
        %607 = vmatpush.msra.mxu0 %v553
        %608 = vmatpush.msra.mxu0 %v552
        %609 = vmatpush.msra.mxu0 %v551
        %610 = vmatpush.msra.mxu0 %v550
        %611 = vmatpush.msra.mxu0 %v549
        %612 = vmatpush.msra.mxu0 %v548
        %613 = vmatpush.msra.mxu0 %v547
        %614 = vmatpush.msra.mxu0 %v546
        %615 = vmatpush.msra.mxu0 %v545
        %616 = vmatpush.msra.mxu0 %v544
        %617 = vmatpush.msra.mxu0 %v543
        %618 = vmatpush.msra.mxu0 %v542
        %619 = vmatpush.msra.mxu0 %v541
        %620 = vmatpush.msra.mxu0 %v540
        %621 = vmatpush.msra.mxu0 %v539
        %622 = vmatmul.f32.gmra.mxu0 %v503
        %v623 = vpop.f32.mrf.mxu0
        %v624 = vadd.f32 %v601, %v623
        %625 = vmatmul.f32.gmra.mxu0 %v502
        %v626 = vpop.f32.mrf.mxu0
        %v627 = vadd.f32 %v604, %v626
        %628 = vdwg.mxu0
        %v629 = vmax.f32 %v624, 0.0
        %v630 = vmax.f32 %v627, 0.0
        %vm631 = vcmask 1043456
        %v632 = vsel %vm631, %v630, -inf
        %v633 = vmax.f32 %v629, %v632
        %v634 = vrot.slane %v633, 4
        %v635 = vmax.f32 %v633, %v634
        %v636 = vrot.slane %v635, 2
        %v637 = vmax.f32 %v635, %v636
        %v638 = vrot.slane %v637, 1
        %v639 = vmax.f32 %v637, %v638
        %s640 = scalar_lea.vmem %s1, 1152
        %v641 = vld [vmem:[%s640] sm:$0xff]
        %v642 = vld [vmem:[%s640 + $0x8] sm:$0xff]
        %v643 = vld [vmem:[%s640 + $0x10] sm:$0xff]
        %v644 = vld [vmem:[%s640 + $0x18] sm:$0xff]
        %v645 = vld [vmem:[%s640 + $0x20] sm:$0xff]
        %v646 = vld [vmem:[%s640 + $0x28] sm:$0xff]
        %v647 = vld [vmem:[%s640 + $0x30] sm:$0xff]
        %v648 = vld [vmem:[%s640 + $0x38] sm:$0xff]
        %v649 = vld [vmem:[%s640 + $0x40] sm:$0xff]
        %v650 = vld [vmem:[%s640 + $0x48] sm:$0xff]
        %v651 = vld [vmem:[%s640 + $0x50] sm:$0xff]
        %v652 = vld [vmem:[%s640 + $0x58] sm:$0xff]
        %v653 = vld [vmem:[%s640 + $0x60] sm:$0xff]
        %v654 = vld [vmem:[%s640 + $0x68] sm:$0xff]
        %v655 = vld [vmem:[%s640 + $0x70] sm:$0xff]
        %v656 = vld [vmem:[%s640 + $0x78] sm:$0xff]
        %v657 = vld [vmem:[%s640 + $0x80] sm:$0xff]
        %v658 = vld [vmem:[%s640 + $0x88] sm:$0xff]
        %v659 = vld [vmem:[%s640 + $0x90] sm:$0xff]
        %v660 = vld [vmem:[%s640 + $0x98] sm:$0xff]
        %v661 = vld [vmem:[%s640 + $0xa0] sm:$0xff]
        %v662 = vld [vmem:[%s640 + $0xa8] sm:$0xff]
        %v663 = vld [vmem:[%s640 + $0xb0] sm:$0xff]
        %v664 = vld [vmem:[%s640 + $0xb8] sm:$0xff]
        %v665 = vld [vmem:[%s640 + $0xc0] sm:$0xff]
        %v666 = vld [vmem:[%s640 + $0xc8] sm:$0xff]
        %v667 = vld [vmem:[%s640 + $0xd0] sm:$0xff]
        %v668 = vld [vmem:[%s640 + $0xd8] sm:$0xff]
        %v669 = vld [vmem:[%s640 + $0xe0] sm:$0xff]
        %v670 = vld [vmem:[%s640 + $0xe8] sm:$0xff]
        %v671 = vld [vmem:[%s640 + $0xf0] sm:$0xff]
        %v672 = vld [vmem:[%s640 + $0xf8] sm:$0xff]
        %v673 = vld [vmem:[%s640 + $0x100] sm:$0xff]
        %v674 = vld [vmem:[%s640 + $0x108] sm:$0xff]
        %v675 = vld [vmem:[%s640 + $0x110] sm:$0xff]
        %v676 = vld [vmem:[%s640 + $0x118] sm:$0xff]
        %v677 = vld [vmem:[%s640 + $0x120] sm:$0xff]
        %v678 = vld [vmem:[%s640 + $0x128] sm:$0xff]
        %v679 = vld [vmem:[%s640 + $0x130] sm:$0xff]
        %v680 = vld [vmem:[%s640 + $0x138] sm:$0xff]
        %v681 = vld [vmem:[%s640 + $0x140] sm:$0xff]
        %v682 = vld [vmem:[%s640 + $0x148] sm:$0xff]
        %v683 = vld [vmem:[%s640 + $0x150] sm:$0xff]
        %v684 = vld [vmem:[%s640 + $0x158] sm:$0xff]
        %v685 = vld [vmem:[%s640 + $0x160] sm:$0xff]
        %v686 = vld [vmem:[%s640 + $0x168] sm:$0xff]
        %v687 = vld [vmem:[%s640 + $0x170] sm:$0xff]
        %v688 = vld [vmem:[%s640 + $0x178] sm:$0xff]
        %s689 = scalar_lea.vmem %s2, 3
        %v690 = vld [vmem:[%s689] sm:$0x1]
        %v692 = vperm.slane %v690, 0
        %694 = vmatpush.msra.mxu0 %v656
        %695 = vmatpush.msra.mxu0 %v655
        %696 = vmatpush.msra.mxu0 %v654
        %697 = vmatpush.msra.mxu0 %v653
        %698 = vmatpush.msra.mxu0 %v652
        %699 = vmatpush.msra.mxu0 %v651
        %700 = vmatpush.msra.mxu0 %v650
        %701 = vmatpush.msra.mxu0 %v649
        %702 = vmatpush.msra.mxu0 %v648
        %703 = vmatpush.msra.mxu0 %v647
        %704 = vmatpush.msra.mxu0 %v646
        %705 = vmatpush.msra.mxu0 %v645
        %706 = vmatpush.msra.mxu0 %v644
        %707 = vmatpush.msra.mxu0 %v643
        %708 = vmatpush.msra.mxu0 %v642
        %709 = vmatpush.msra.mxu0 %v641
        %710 = vmatmul.f32.gmra.mxu0 %v222
        %v711 = vpop.f32.mrf.mxu0
        %v712 = vadd.f32 %v692, %v711
        %713 = vmatmul.f32.gmra.mxu0 %v223
        %v714 = vpop.f32.mrf.mxu0
        %v715 = vadd.f32 %v692, %v714
        %716 = vdwg.mxu0
        %717 = vmatpush.msra.mxu0 %v672
        %718 = vmatpush.msra.mxu0 %v671
        %719 = vmatpush.msra.mxu0 %v670
        %720 = vmatpush.msra.mxu0 %v669
        %721 = vmatpush.msra.mxu0 %v668
        %722 = vmatpush.msra.mxu0 %v667
        %723 = vmatpush.msra.mxu0 %v666
        %724 = vmatpush.msra.mxu0 %v665
        %725 = vmatpush.msra.mxu0 %v664
        %726 = vmatpush.msra.mxu0 %v663
        %727 = vmatpush.msra.mxu0 %v662
        %728 = vmatpush.msra.mxu0 %v661
        %729 = vmatpush.msra.mxu0 %v660
        %730 = vmatpush.msra.mxu0 %v659
        %731 = vmatpush.msra.mxu0 %v658
        %732 = vmatpush.msra.mxu0 %v657
        %733 = vmatmul.f32.gmra.mxu0 %v229
        %v734 = vpop.f32.mrf.mxu0
        %v735 = vadd.f32 %v712, %v734
        %736 = vmatmul.f32.gmra.mxu0 %v228
        %v737 = vpop.f32.mrf.mxu0
        %v738 = vadd.f32 %v715, %v737
        %739 = vdwg.mxu0
        %740 = vmatpush.msra.mxu0 %v688
        %741 = vmatpush.msra.mxu0 %v687
        %742 = vmatpush.msra.mxu0 %v686
        %743 = vmatpush.msra.mxu0 %v685
        %744 = vmatpush.msra.mxu0 %v684
        %745 = vmatpush.msra.mxu0 %v683
        %746 = vmatpush.msra.mxu0 %v682
        %747 = vmatpush.msra.mxu0 %v681
        %748 = vmatpush.msra.mxu0 %v680
        %749 = vmatpush.msra.mxu0 %v679
        %750 = vmatpush.msra.mxu0 %v678
        %751 = vmatpush.msra.mxu0 %v677
        %752 = vmatpush.msra.mxu0 %v676
        %753 = vmatpush.msra.mxu0 %v675
        %754 = vmatpush.msra.mxu0 %v674
        %755 = vmatpush.msra.mxu0 %v673
        %756 = vmatmul.f32.gmra.mxu0 %v235
        %v757 = vpop.f32.mrf.mxu0
        %v758 = vadd.f32 %v735, %v757
        %759 = vmatmul.f32.gmra.mxu0 %v234
        %v760 = vpop.f32.mrf.mxu0
        %v761 = vadd.f32 %v738, %v760
        %762 = vdwg.mxu0
        %v763 = vmax.f32 %v758, 0.0
        %v764 = vmax.f32 %v761, 0.0
        %v767 = vrot.slane %v763, 1
        %v768 = vrot.slane %v764, 1
        %v769 = vsel %vm226, %v767, %v768
        %v772 = vrot.slane %v763, 2
        %v773 = vrot.slane %v764, 2
        %v774 = vsel %vm232, %v772, %v773
        %s777 = scalar_lea.vmem %s1, 1536
        %v778 = vld [vmem:[%s777] sm:$0xff]
        %v779 = vld [vmem:[%s777 + $0x8] sm:$0xff]
        %v780 = vld [vmem:[%s777 + $0x10] sm:$0xff]
        %v781 = vld [vmem:[%s777 + $0x18] sm:$0xff]
        %v782 = vld [vmem:[%s777 + $0x20] sm:$0xff]
        %v783 = vld [vmem:[%s777 + $0x28] sm:$0xff]
        %v784 = vld [vmem:[%s777 + $0x30] sm:$0xff]
        %v785 = vld [vmem:[%s777 + $0x38] sm:$0xff]
        %v786 = vld [vmem:[%s777 + $0x40] sm:$0xff]
        %v787 = vld [vmem:[%s777 + $0x48] sm:$0xff]
        %v788 = vld [vmem:[%s777 + $0x50] sm:$0xff]
        %v789 = vld [vmem:[%s777 + $0x58] sm:$0xff]
        %v790 = vld [vmem:[%s777 + $0x60] sm:$0xff]
        %v791 = vld [vmem:[%s777 + $0x68] sm:$0xff]
        %v792 = vld [vmem:[%s777 + $0x70] sm:$0xff]
        %v793 = vld [vmem:[%s777 + $0x78] sm:$0xff]
        %v794 = vld [vmem:[%s777 + $0x80] sm:$0xff]
        %v795 = vld [vmem:[%s777 + $0x88] sm:$0xff]
        %v796 = vld [vmem:[%s777 + $0x90] sm:$0xff]
        %v797 = vld [vmem:[%s777 + $0x98] sm:$0xff]
        %v798 = vld [vmem:[%s777 + $0xa0] sm:$0xff]
        %v799 = vld [vmem:[%s777 + $0xa8] sm:$0xff]
        %v800 = vld [vmem:[%s777 + $0xb0] sm:$0xff]
        %v801 = vld [vmem:[%s777 + $0xb8] sm:$0xff]
        %v802 = vld [vmem:[%s777 + $0xc0] sm:$0xff]
        %v803 = vld [vmem:[%s777 + $0xc8] sm:$0xff]
        %v804 = vld [vmem:[%s777 + $0xd0] sm:$0xff]
        %v805 = vld [vmem:[%s777 + $0xd8] sm:$0xff]
        %v806 = vld [vmem:[%s777 + $0xe0] sm:$0xff]
        %v807 = vld [vmem:[%s777 + $0xe8] sm:$0xff]
        %v808 = vld [vmem:[%s777 + $0xf0] sm:$0xff]
        %v809 = vld [vmem:[%s777 + $0xf8] sm:$0xff]
        %v810 = vld [vmem:[%s777 + $0x100] sm:$0xff]
        %v811 = vld [vmem:[%s777 + $0x108] sm:$0xff]
        %v812 = vld [vmem:[%s777 + $0x110] sm:$0xff]
        %v813 = vld [vmem:[%s777 + $0x118] sm:$0xff]
        %v814 = vld [vmem:[%s777 + $0x120] sm:$0xff]
        %v815 = vld [vmem:[%s777 + $0x128] sm:$0xff]
        %v816 = vld [vmem:[%s777 + $0x130] sm:$0xff]
        %v817 = vld [vmem:[%s777 + $0x138] sm:$0xff]
        %v818 = vld [vmem:[%s777 + $0x140] sm:$0xff]
        %v819 = vld [vmem:[%s777 + $0x148] sm:$0xff]
        %v820 = vld [vmem:[%s777 + $0x150] sm:$0xff]
        %v821 = vld [vmem:[%s777 + $0x158] sm:$0xff]
        %v822 = vld [vmem:[%s777 + $0x160] sm:$0xff]
        %v823 = vld [vmem:[%s777 + $0x168] sm:$0xff]
        %v824 = vld [vmem:[%s777 + $0x170] sm:$0xff]
        %v825 = vld [vmem:[%s777 + $0x178] sm:$0xff]
        %s826 = scalar_lea.vmem %s2, 4
        %v827 = vld [vmem:[%s826] sm:$0x1]
        %v829 = vperm.slane %v827, 0
        %831 = vmatpush.msra.mxu0 %v793
        %832 = vmatpush.msra.mxu0 %v792
        %833 = vmatpush.msra.mxu0 %v791
        %834 = vmatpush.msra.mxu0 %v790
        %835 = vmatpush.msra.mxu0 %v789
        %836 = vmatpush.msra.mxu0 %v788
        %837 = vmatpush.msra.mxu0 %v787
        %838 = vmatpush.msra.mxu0 %v786
        %839 = vmatpush.msra.mxu0 %v785
        %840 = vmatpush.msra.mxu0 %v784
        %841 = vmatpush.msra.mxu0 %v783
        %842 = vmatpush.msra.mxu0 %v782
        %843 = vmatpush.msra.mxu0 %v781
        %844 = vmatpush.msra.mxu0 %v780
        %845 = vmatpush.msra.mxu0 %v779
        %846 = vmatpush.msra.mxu0 %v778
        %847 = vmatmul.f32.gmra.mxu0 %v763
        %v848 = vpop.f32.mrf.mxu0
        %v849 = vadd.f32 %v829, %v848
        %850 = vmatmul.f32.gmra.mxu0 %v764
        %v851 = vpop.f32.mrf.mxu0
        %v852 = vadd.f32 %v829, %v851
        %853 = vdwg.mxu0
        %854 = vmatpush.msra.mxu0 %v809
        %855 = vmatpush.msra.mxu0 %v808
        %856 = vmatpush.msra.mxu0 %v807
        %857 = vmatpush.msra.mxu0 %v806
        %858 = vmatpush.msra.mxu0 %v805
        %859 = vmatpush.msra.mxu0 %v804
        %860 = vmatpush.msra.mxu0 %v803
        %861 = vmatpush.msra.mxu0 %v802
        %862 = vmatpush.msra.mxu0 %v801
        %863 = vmatpush.msra.mxu0 %v800
        %864 = vmatpush.msra.mxu0 %v799
        %865 = vmatpush.msra.mxu0 %v798
        %866 = vmatpush.msra.mxu0 %v797
        %867 = vmatpush.msra.mxu0 %v796
        %868 = vmatpush.msra.mxu0 %v795
        %869 = vmatpush.msra.mxu0 %v794
        %870 = vmatmul.f32.gmra.mxu0 %v769
        %v871 = vpop.f32.mrf.mxu0
        %v872 = vadd.f32 %v849, %v871
        %873 = vmatmul.f32.gmra.mxu0 %v768
        %v874 = vpop.f32.mrf.mxu0
        %v875 = vadd.f32 %v852, %v874
        %876 = vdwg.mxu0
        %877 = vmatpush.msra.mxu0 %v825
        %878 = vmatpush.msra.mxu0 %v824
        %879 = vmatpush.msra.mxu0 %v823
        %880 = vmatpush.msra.mxu0 %v822
        %881 = vmatpush.msra.mxu0 %v821
        %882 = vmatpush.msra.mxu0 %v820
        %883 = vmatpush.msra.mxu0 %v819
        %884 = vmatpush.msra.mxu0 %v818
        %885 = vmatpush.msra.mxu0 %v817
        %886 = vmatpush.msra.mxu0 %v816
        %887 = vmatpush.msra.mxu0 %v815
        %888 = vmatpush.msra.mxu0 %v814
        %889 = vmatpush.msra.mxu0 %v813
        %890 = vmatpush.msra.mxu0 %v812
        %891 = vmatpush.msra.mxu0 %v811
        %892 = vmatpush.msra.mxu0 %v810
        %893 = vmatmul.f32.gmra.mxu0 %v774
        %v894 = vpop.f32.mrf.mxu0
        %v895 = vadd.f32 %v872, %v894
        %896 = vmatmul.f32.gmra.mxu0 %v773
        %v897 = vpop.f32.mrf.mxu0
        %v898 = vadd.f32 %v875, %v897
        %899 = vdwg.mxu0
        %v900 = vmax.f32 %v895, 0.0
        %v901 = vmax.f32 %v898, 0.0
        %v904 = vrot.slane %v900, 1
        %v905 = vrot.slane %v901, 1
        %v906 = vsel %vm226, %v904, %v905
        %v909 = vrot.slane %v900, 2
        %v910 = vrot.slane %v901, 2
        %v911 = vsel %vm232, %v909, %v910
        %s914 = scalar_lea.vmem %s1, 1920
        %v915 = vld [vmem:[%s914] sm:$0xff]
        %v916 = vld [vmem:[%s914 + $0x8] sm:$0xff]
        %v917 = vld [vmem:[%s914 + $0x10] sm:$0xff]
        %v918 = vld [vmem:[%s914 + $0x18] sm:$0xff]
        %v919 = vld [vmem:[%s914 + $0x20] sm:$0xff]
        %v920 = vld [vmem:[%s914 + $0x28] sm:$0xff]
        %v921 = vld [vmem:[%s914 + $0x30] sm:$0xff]
        %v922 = vld [vmem:[%s914 + $0x38] sm:$0xff]
        %v923 = vld [vmem:[%s914 + $0x40] sm:$0xff]
        %v924 = vld [vmem:[%s914 + $0x48] sm:$0xff]
        %v925 = vld [vmem:[%s914 + $0x50] sm:$0xff]
        %v926 = vld [vmem:[%s914 + $0x58] sm:$0xff]
        %v927 = vld [vmem:[%s914 + $0x60] sm:$0xff]
        %v928 = vld [vmem:[%s914 + $0x68] sm:$0xff]
        %v929 = vld [vmem:[%s914 + $0x70] sm:$0xff]
        %v930 = vld [vmem:[%s914 + $0x78] sm:$0xff]
        %v931 = vld [vmem:[%s914 + $0x80] sm:$0xff]
        %v932 = vld [vmem:[%s914 + $0x88] sm:$0xff]
        %v933 = vld [vmem:[%s914 + $0x90] sm:$0xff]
        %v934 = vld [vmem:[%s914 + $0x98] sm:$0xff]
        %v935 = vld [vmem:[%s914 + $0xa0] sm:$0xff]
        %v936 = vld [vmem:[%s914 + $0xa8] sm:$0xff]
        %v937 = vld [vmem:[%s914 + $0xb0] sm:$0xff]
        %v938 = vld [vmem:[%s914 + $0xb8] sm:$0xff]
        %v939 = vld [vmem:[%s914 + $0xc0] sm:$0xff]
        %v940 = vld [vmem:[%s914 + $0xc8] sm:$0xff]
        %v941 = vld [vmem:[%s914 + $0xd0] sm:$0xff]
        %v942 = vld [vmem:[%s914 + $0xd8] sm:$0xff]
        %v943 = vld [vmem:[%s914 + $0xe0] sm:$0xff]
        %v944 = vld [vmem:[%s914 + $0xe8] sm:$0xff]
        %v945 = vld [vmem:[%s914 + $0xf0] sm:$0xff]
        %v946 = vld [vmem:[%s914 + $0xf8] sm:$0xff]
        %v947 = vld [vmem:[%s914 + $0x100] sm:$0xff]
        %v948 = vld [vmem:[%s914 + $0x108] sm:$0xff]
        %v949 = vld [vmem:[%s914 + $0x110] sm:$0xff]
        %v950 = vld [vmem:[%s914 + $0x118] sm:$0xff]
        %v951 = vld [vmem:[%s914 + $0x120] sm:$0xff]
        %v952 = vld [vmem:[%s914 + $0x128] sm:$0xff]
        %v953 = vld [vmem:[%s914 + $0x130] sm:$0xff]
        %v954 = vld [vmem:[%s914 + $0x138] sm:$0xff]
        %v955 = vld [vmem:[%s914 + $0x140] sm:$0xff]
        %v956 = vld [vmem:[%s914 + $0x148] sm:$0xff]
        %v957 = vld [vmem:[%s914 + $0x150] sm:$0xff]
        %v958 = vld [vmem:[%s914 + $0x158] sm:$0xff]
        %v959 = vld [vmem:[%s914 + $0x160] sm:$0xff]
        %v960 = vld [vmem:[%s914 + $0x168] sm:$0xff]
        %v961 = vld [vmem:[%s914 + $0x170] sm:$0xff]
        %v962 = vld [vmem:[%s914 + $0x178] sm:$0xff]
        %s963 = scalar_lea.vmem %s2, 5
        %v964 = vld [vmem:[%s963] sm:$0x1]
        %v966 = vperm.slane %v964, 0
        %968 = vmatpush.msra.mxu0 %v930
        %969 = vmatpush.msra.mxu0 %v929
        %970 = vmatpush.msra.mxu0 %v928
        %971 = vmatpush.msra.mxu0 %v927
        %972 = vmatpush.msra.mxu0 %v926
        %973 = vmatpush.msra.mxu0 %v925
        %974 = vmatpush.msra.mxu0 %v924
        %975 = vmatpush.msra.mxu0 %v923
        %976 = vmatpush.msra.mxu0 %v922
        %977 = vmatpush.msra.mxu0 %v921
        %978 = vmatpush.msra.mxu0 %v920
        %979 = vmatpush.msra.mxu0 %v919
        %980 = vmatpush.msra.mxu0 %v918
        %981 = vmatpush.msra.mxu0 %v917
        %982 = vmatpush.msra.mxu0 %v916
        %983 = vmatpush.msra.mxu0 %v915
        %984 = vmatmul.f32.gmra.mxu0 %v900
        %v985 = vpop.f32.mrf.mxu0
        %v986 = vadd.f32 %v966, %v985
        %987 = vmatmul.f32.gmra.mxu0 %v901
        %v988 = vpop.f32.mrf.mxu0
        %v989 = vadd.f32 %v966, %v988
        %990 = vdwg.mxu0
        %991 = vmatpush.msra.mxu0 %v946
        %992 = vmatpush.msra.mxu0 %v945
        %993 = vmatpush.msra.mxu0 %v944
        %994 = vmatpush.msra.mxu0 %v943
        %995 = vmatpush.msra.mxu0 %v942
        %996 = vmatpush.msra.mxu0 %v941
        %997 = vmatpush.msra.mxu0 %v940
        %998 = vmatpush.msra.mxu0 %v939
        %999 = vmatpush.msra.mxu0 %v938
        %1000 = vmatpush.msra.mxu0 %v937
        %1001 = vmatpush.msra.mxu0 %v936
        %1002 = vmatpush.msra.mxu0 %v935
        %1003 = vmatpush.msra.mxu0 %v934
        %1004 = vmatpush.msra.mxu0 %v933
        %1005 = vmatpush.msra.mxu0 %v932
        %1006 = vmatpush.msra.mxu0 %v931
        %1007 = vmatmul.f32.gmra.mxu0 %v906
        %v1008 = vpop.f32.mrf.mxu0
        %v1009 = vadd.f32 %v986, %v1008
        %1010 = vmatmul.f32.gmra.mxu0 %v905
        %v1011 = vpop.f32.mrf.mxu0
        %v1012 = vadd.f32 %v989, %v1011
        %1013 = vdwg.mxu0
        %1014 = vmatpush.msra.mxu0 %v962
        %1015 = vmatpush.msra.mxu0 %v961
        %1016 = vmatpush.msra.mxu0 %v960
        %1017 = vmatpush.msra.mxu0 %v959
        %1018 = vmatpush.msra.mxu0 %v958
        %1019 = vmatpush.msra.mxu0 %v957
        %1020 = vmatpush.msra.mxu0 %v956
        %1021 = vmatpush.msra.mxu0 %v955
        %1022 = vmatpush.msra.mxu0 %v954
        %1023 = vmatpush.msra.mxu0 %v953
        %1024 = vmatpush.msra.mxu0 %v952
        %1025 = vmatpush.msra.mxu0 %v951
        %1026 = vmatpush.msra.mxu0 %v950
        %1027 = vmatpush.msra.mxu0 %v949
        %1028 = vmatpush.msra.mxu0 %v948
        %1029 = vmatpush.msra.mxu0 %v947
        %1030 = vmatmul.f32.gmra.mxu0 %v911
        %v1031 = vpop.f32.mrf.mxu0
        %v1032 = vadd.f32 %v1009, %v1031
        %1033 = vmatmul.f32.gmra.mxu0 %v910
        %v1034 = vpop.f32.mrf.mxu0
        %v1035 = vadd.f32 %v1012, %v1034
        %1036 = vdwg.mxu0
        %v1037 = vmax.f32 %v1032, 0.0
        %v1038 = vmax.f32 %v1035, 0.0
        %vm1039 = vcmask 1041408
        %v1040 = vsel %vm1039, %v1038, -inf
        %v1041 = vmax.f32 %v1037, %v1040
        %v1042 = vrot.slane %v1041, 4
        %v1043 = vmax.f32 %v1041, %v1042
        %v1044 = vrot.slane %v1043, 2
        %v1045 = vmax.f32 %v1043, %v1044
        %v1046 = vrot.slane %v1045, 1
        %v1047 = vmax.f32 %v1045, %v1046
        %v1048 = vld [vmem:[%s3] sm:$0xff]
        %v1049 = vld [vmem:[%s3 + $0x8] sm:$0xff]
        %v1050 = vld [vmem:[%s3 + $0x10] sm:$0xff]
        %v1051 = vld [vmem:[%s3 + $0x18] sm:$0xff]
        %v1052 = vld [vmem:[%s3 + $0x20] sm:$0xff]
        %v1053 = vld [vmem:[%s3 + $0x28] sm:$0xff]
        %v1054 = vld [vmem:[%s3 + $0x30] sm:$0xff]
        %v1055 = vld [vmem:[%s3 + $0x38] sm:$0xff]
        %v1056 = vld [vmem:[%s3 + $0x40] sm:$0xff]
        %v1057 = vld [vmem:[%s3 + $0x48] sm:$0xff]
        %v1058 = vld [vmem:[%s3 + $0x50] sm:$0xff]
        %v1059 = vld [vmem:[%s3 + $0x58] sm:$0xff]
        %v1060 = vld [vmem:[%s3 + $0x60] sm:$0xff]
        %v1061 = vld [vmem:[%s3 + $0x68] sm:$0xff]
        %v1062 = vld [vmem:[%s3 + $0x70] sm:$0xff]
        %v1063 = vld [vmem:[%s3 + $0x78] sm:$0xff]
        %v1064 = vld [vmem:[%s3 + $0x80] sm:$0xff]
        %v1065 = vld [vmem:[%s3 + $0x88] sm:$0xff]
        %v1066 = vld [vmem:[%s3 + $0x90] sm:$0xff]
        %v1067 = vld [vmem:[%s3 + $0x98] sm:$0xff]
        %v1068 = vld [vmem:[%s3 + $0xa0] sm:$0xff]
        %v1069 = vld [vmem:[%s3 + $0xa8] sm:$0xff]
        %v1070 = vld [vmem:[%s3 + $0xb0] sm:$0xff]
        %v1071 = vld [vmem:[%s3 + $0xb8] sm:$0xff]
        %v1072 = vld [vmem:[%s3 + $0xc0] sm:$0xff]
        %v1073 = vld [vmem:[%s3 + $0xc8] sm:$0xff]
        %v1074 = vld [vmem:[%s3 + $0xd0] sm:$0xff]
        %v1075 = vld [vmem:[%s3 + $0xd8] sm:$0xff]
        %v1076 = vld [vmem:[%s3 + $0xe0] sm:$0xff]
        %v1077 = vld [vmem:[%s3 + $0xe8] sm:$0xff]
        %v1078 = vld [vmem:[%s3 + $0xf0] sm:$0xff]
        %v1079 = vld [vmem:[%s3 + $0xf8] sm:$0xff]
        %v1080 = vld [vmem:[%s3 + $0x100] sm:$0xff]
        %v1081 = vld [vmem:[%s3 + $0x108] sm:$0xff]
        %v1082 = vld [vmem:[%s3 + $0x110] sm:$0xff]
        %v1083 = vld [vmem:[%s3 + $0x118] sm:$0xff]
        %v1084 = vld [vmem:[%s3 + $0x120] sm:$0xff]
        %v1085 = vld [vmem:[%s3 + $0x128] sm:$0xff]
        %v1086 = vld [vmem:[%s3 + $0x130] sm:$0xff]
        %v1087 = vld [vmem:[%s3 + $0x138] sm:$0xff]
        %v1088 = vld [vmem:[%s3 + $0x140] sm:$0xff]
        %v1089 = vld [vmem:[%s3 + $0x148] sm:$0xff]
        %v1090 = vld [vmem:[%s3 + $0x150] sm:$0xff]
        %v1091 = vld [vmem:[%s3 + $0x158] sm:$0xff]
        %v1092 = vld [vmem:[%s3 + $0x160] sm:$0xff]
        %v1093 = vld [vmem:[%s3 + $0x168] sm:$0xff]
        %v1094 = vld [vmem:[%s3 + $0x170] sm:$0xff]
        %v1095 = vld [vmem:[%s3 + $0x178] sm:$0xff]
        %v1096 = vld [vmem:[%s4] sm:$0x1]
        %1097 = vmatpush.msra.mxu0 %v1063
        %1098 = vmatpush.msra.mxu0 %v1062
        %1099 = vmatpush.msra.mxu0 %v1061
        %1100 = vmatpush.msra.mxu0 %v1060
        %1101 = vmatpush.msra.mxu0 %v1059
        %1102 = vmatpush.msra.mxu0 %v1058
        %1103 = vmatpush.msra.mxu0 %v1057
        %1104 = vmatpush.msra.mxu0 %v1056
        %1105 = vmatpush.msra.mxu0 %v1055
        %1106 = vmatpush.msra.mxu0 %v1054
        %1107 = vmatpush.msra.mxu0 %v1053
        %1108 = vmatpush.msra.mxu0 %v1052
        %1109 = vmatpush.msra.mxu0 %v1051
        %1110 = vmatpush.msra.mxu0 %v1050
        %1111 = vmatpush.msra.mxu0 %v1049
        %1112 = vmatpush.msra.mxu0 %v1048
        %1113 = vmatmul.f32.gmra.mxu0 %v368
        %v1114 = vpop.f32.mrf.mxu0
        %v1115 = vadd.f32 %v1096, %v1114
        %1116 = vdwg.mxu0
        %1117 = vmatpush.msra.mxu0 %v1079
        %1118 = vmatpush.msra.mxu0 %v1078
        %1119 = vmatpush.msra.mxu0 %v1077
        %1120 = vmatpush.msra.mxu0 %v1076
        %1121 = vmatpush.msra.mxu0 %v1075
        %1122 = vmatpush.msra.mxu0 %v1074
        %1123 = vmatpush.msra.mxu0 %v1073
        %1124 = vmatpush.msra.mxu0 %v1072
        %1125 = vmatpush.msra.mxu0 %v1071
        %1126 = vmatpush.msra.mxu0 %v1070
        %1127 = vmatpush.msra.mxu0 %v1069
        %1128 = vmatpush.msra.mxu0 %v1068
        %1129 = vmatpush.msra.mxu0 %v1067
        %1130 = vmatpush.msra.mxu0 %v1066
        %1131 = vmatpush.msra.mxu0 %v1065
        %1132 = vmatpush.msra.mxu0 %v1064
        %1133 = vmatmul.f32.gmra.mxu0 %v639
        %v1134 = vpop.f32.mrf.mxu0
        %v1135 = vadd.f32 %v1115, %v1134
        %1136 = vdwg.mxu0
        %1137 = vmatpush.msra.mxu0 %v1095
        %1138 = vmatpush.msra.mxu0 %v1094
        %1139 = vmatpush.msra.mxu0 %v1093
        %1140 = vmatpush.msra.mxu0 %v1092
        %1141 = vmatpush.msra.mxu0 %v1091
        %1142 = vmatpush.msra.mxu0 %v1090
        %1143 = vmatpush.msra.mxu0 %v1089
        %1144 = vmatpush.msra.mxu0 %v1088
        %1145 = vmatpush.msra.mxu0 %v1087
        %1146 = vmatpush.msra.mxu0 %v1086
        %1147 = vmatpush.msra.mxu0 %v1085
        %1148 = vmatpush.msra.mxu0 %v1084
        %1149 = vmatpush.msra.mxu0 %v1083
        %1150 = vmatpush.msra.mxu0 %v1082
        %1151 = vmatpush.msra.mxu0 %v1081
        %1152 = vmatpush.msra.mxu0 %v1080
        %1153 = vmatmul.f32.gmra.mxu0 %v1047
        %v1154 = vpop.f32.mrf.mxu0
        %v1155 = vadd.f32 %v1135, %v1154
        %1156 = vdwg.mxu0
        %1157 = vst [vmem:[%s216] sm:$0x1] %v1155
        %s1158 = sand.u32 %s137, 1
        %s1159 = scalar_lea.sflag [#allocation3], %s1158
        %s1160 = sand.u32 %s137, 1
        %s1161 = scalar_lea.vmem [#allocation2], %s1160
        // Predicated region
        $region41: #{target_representation.1} parent=39 // pred_check
          %p1162 = pneg %p147
        $region42: #{target_representation.1} parent=39 // pred_check_branch
          %1164 = sbr.rel (%p1162) target = $region44
        $region43: #{target_representation.1} parent=39 // pred_region
          %1166 = vsyncadd %s1159, 0
          %s1167 = scalar_lea.hbm %s5, %s19
          %s1169 = sshll.u32 %s1161, 4
          %s1170 = int_to_ptr.vmem [resolvable:$true] %s1169
          %s1171 = sshll.u32 %s1167, 4
          %s1172 = int_to_ptr.hbm [resolvable:$true] %s1171
          %1174 = dma.vmem_to_hbm [thread:$0]  %s1170, 16, %s1172, %s1159
        $region44: #{target_representation.1} parent=39 // pred_fallthru
          _
      $region40: #{target_representation.1} parent=5 // pred_fallthru
        _
      %p1175 = scmp.le.s32.totalorder 2, %s14
      // Predicated region
      $region45: #{target_representation.1} parent=5 // pred_check
        %p1176 = pneg %p1175
      $region46: #{target_representation.1} parent=5 // pred_check_branch
        %1178 = sbr.rel (%p1176) target = $region48
      $region47: #{target_representation.1} parent=5 // pred_region
        %s1179 = ssub.s32 %s14, 2
        // Predicated region
        $region49: #{target_representation.1} parent=47 // pred_check
          %p1180 = pneg %p153
        $region50: #{target_representation.1} parent=47 // pred_check_branch
          %1182 = sbr.rel (%p1180) target = $region52
        $region51: #{target_representation.1} parent=47 // pred_region
          %s1183 = sand.u32 %s138, 1
          %s1184 = scalar_lea.sflag [#allocation3], %s1183
          %s1185 = sand.u32 %s138, 1
          %s1186 = scalar_lea.vmem [#allocation2], %s1185
          %1188 = dma.done %s1184, 16
        $region52: #{target_representation.1} parent=47 // pred_fallthru
          _
      $region48: #{target_representation.1} parent=5 // pred_fallthru
        _
    $region6: #{target_representation.1} parent=1 // loop_footer
      %s18 = sadd.s32 1, %s14
    $region7: #{target_representation.1} parent=1 // loop_footer_branch
      %13 = sbr.rel target = $region3
    $region8: #{target_representation.1} parent=1 // loop_exit
      _
    %1189 = vsyncpa [#allocation3], 1
    %s1190 = scalar_lea.sflag [#allocation3], 1
    %1191 = vsyncpa %s1190, 1

</llo_original>
